<compile_context>
chip_gen: v7x
topology: tpu7x:2x2x1
jax: 0.10.0
libtpu: 0.0.40
codegen_flags: <defaults>
</compile_context>

<pallas_src>
import jax
import jax.numpy as jnp
from jax.experimental import pallas as pl
from jax.experimental.pallas import tpu as pltpu


def _make_fused_lstm_kernel(num_layers, hidden_dim, seq_len, batch_pad):
    H, T, BP, L = hidden_dim, seq_len, batch_pad, num_layers

    def kernel(x_ref, *refs):
        # refs = [w_ih_0, w_hh_0, b_0, ..., w_ih_{L-1}, w_hh_{L-1}, b_{L-1},
        #         fc_w, fc_b, out_ref, xp_scratch, hseq_scratch]
        layer_refs = refs[:3 * L]
        fcw_ref, fcb_ref, out_ref, xp_ref, hseq_ref = refs[3 * L:]

        # Lane mask selecting the g-gate block of the lane-dense (BP, 4H) gate
        # vector (PyTorch gate order i, f, g, o). Hoisted: built once per kernel.
        lane = jax.lax.broadcasted_iota(jnp.int32, (BP, 4 * H), 1)
        is_g = jnp.logical_and(lane >= 2 * H, lane < 3 * H)
        pre_scale = jnp.where(is_g, 1.0, 0.5).astype(jnp.float32)

        cur_in = x_ref[...]                       # (T*BP, D_in) bf16, time-major rows
        last_h = None
        for l in range(L):
            w_ih = layer_refs[3 * l][...]         # (D_in, 4H) bf16
            w_hh = layer_refs[3 * l + 1][...]     # (H,    4H) bf16
            b = layer_refs[3 * l + 2][...]        # (1,    4H) f32

            # One batched input projection for ALL timesteps (single MXU op,
            # off the sequential h/c critical path), accumulated in f32.
            xp_ref[...] = (
                jnp.dot(cur_in, w_ih, preferred_element_type=jnp.float32) + b)

            h0 = jnp.zeros((BP, H), jnp.float32)
            c0 = jnp.zeros((BP, H), jnp.float32)
            write_hseq = l < L - 1                # last layer only needs h_T

            def step(t, carry, _w_hh=w_hh, _write=write_hseq):
                h, c = carry
                row = pl.multiple_of(t * BP, BP)  # BP % 8 == 0 -> aligned rows
                gates = xp_ref[pl.ds(row, BP), :] + jnp.dot(
                    h.astype(_w_hh.dtype), _w_hh,
                    preferred_element_type=jnp.float32)
                # Single transcendental over the full (BP, 4H) width:
                # sigmoid(x) = 0.5 * (1 + tanh(x/2)).
                tp = jnp.tanh(gates * pre_scale)
                act = jnp.where(is_g, tp, 0.5 * (tp + 1.0))
                i_g = act[:, 0 * H:1 * H]
                f_g = act[:, 1 * H:2 * H]
                g_g = act[:, 2 * H:3 * H]
                o_g = act[:, 3 * H:4 * H]
                c_new = f_g * c + i_g * g_g
                h_new = o_g * jnp.tanh(c_new)
                if _write:
                    hseq_ref[pl.ds(row, BP), :] = h_new
                return (h_new, c_new)

            last_h, _ = jax.lax.fori_loop(0, T, step, (h0, c0), unroll=True)
            if l < L - 1:
                cur_in = hseq_ref[...].astype(jnp.bfloat16)   # feeds next layer

        # Fused final Linear on h_T; lane-dense (BP, O_pad) store.
        out = (jnp.dot(last_h.astype(fcw_ref.dtype), fcw_ref[...],
                       preferred_element_type=jnp.float32) + fcb_ref[...])
        out_ref[...] = out.astype(out_ref.dtype)

    return kernel


def _full_spec(a):
    zeros = (0,) * a.ndim
    return pl.BlockSpec(a.shape, lambda *_: zeros)


@jax.jit
def lstm_forward(params, x):
    """x: (B, T, input_dim) -> (B, output_dim). Matches LSTM.forward semantics."""
    B, T, D = x.shape
    layers = params["layers"]
    L = len(layers)
    H = layers[0]["w_hh"].shape[0]
    O = params["fc_w"].shape[1]

    BP = ((B + 7) // 8) * 8                   # sublane-aligned batch pad
    OP = ((O + 127) // 128) * 128             # lane-dense output pad

    # Time-major, batch-padded, bf16 input: row (t*BP + b) of (T*BP, D).
    x_tm = jnp.transpose(x, (1, 0, 2))
    x_tm = jnp.pad(x_tm, ((0, 0), (0, BP - B), (0, 0)))
    x_flat = x_tm.reshape(T * BP, D).astype(jnp.bfloat16)

    fc_w = jnp.zeros((H, OP), jnp.bfloat16).at[:, :O].set(
        params["fc_w"].astype(jnp.bfloat16))
    fc_b = jnp.zeros((1, OP), jnp.float32).at[:, :O].set(
        params["fc_b"].astype(jnp.float32))

    args = [x_flat]
    for lp in layers:
        args += [lp["w_ih"].astype(jnp.bfloat16),
                 lp["w_hh"].astype(jnp.bfloat16),
                 lp["b"].astype(jnp.float32)]
    args += [fc_w, fc_b]

    scratch_shapes = [pltpu.VMEM((T * BP, 4 * H), jnp.float32),   # x@W_ih + b
                      pltpu.VMEM((T * BP, H), jnp.float32)]       # h_seq of a layer

    # Explicit VMEM budget: inputs (double-buffered) + output + scratch + slack.
    in_bytes = sum(int(a.size) * a.dtype.itemsize for a in args)
    out_bytes = BP * OP * 4
    scratch_bytes = (T * BP * 4 * H + T * BP * H) * 4
    vmem_limit = int(min(64 * 1024 * 1024,
                         max(4 * 1024 * 1024,
                             2 * (in_bytes + out_bytes) + scratch_bytes + (2 << 20))))

    kernel = _make_fused_lstm_kernel(L, H, T, BP)
    out_pad = pl.pallas_call(
        kernel,
        out_shape=jax.ShapeDtypeStruct((BP, OP), jnp.float32),
        in_specs=[_full_spec(a) for a in args],
        out_specs=pl.BlockSpec((BP, OP), lambda *_: (0, 0)),
        scratch_shapes=scratch_shapes,
        compiler_params=pltpu.CompilerParams(vmem_limit_bytes=vmem_limit),
    )(*args)
    return out_pad[:B, :O]


def init_params(key, input_dim, hidden_dim, num_layers, output_dim):
    """PyTorch-style init: every tensor ~U(-1/sqrt(H), 1/sqrt(H)); b = b_ih + b_hh."""
    params = {"layers": []}
    bound = 1.0 / jnp.sqrt(jnp.float32(hidden_dim))
    for layer in range(num_layers):
        d_in = input_dim if layer == 0 else hidden_dim
        key, k1, k2, k3, k4 = jax.random.split(key, 5)
        b_ih = jax.random.uniform(k3, (1, 4 * hidden_dim), jnp.float32, -bound, bound)
        b_hh = jax.random.uniform(k4, (1, 4 * hidden_dim), jnp.float32, -bound, bound)
        params["layers"].append({
            # stored pre-transposed for (x @ W); gate order i, f, g, o
            "w_ih": jax.random.uniform(k1, (d_in, 4 * hidden_dim),
                                       jnp.float32, -bound, bound),
            "w_hh": jax.random.uniform(k2, (hidden_dim, 4 * hidden_dim),
                                       jnp.float32, -bound, bound),
            "b": b_ih + b_hh,           # folded bias, correct summed distribution
        })
    key, k1, k2 = jax.random.split(key, 3)
    fc_bound = 1.0 / jnp.sqrt(jnp.float32(hidden_dim))
    params["fc_w"] = jax.random.uniform(k1, (hidden_dim, output_dim),
                                        jnp.float32, -fc_bound, fc_bound)
    params["fc_b"] = jax.random.uniform(k2, (1, output_dim),
                                        jnp.float32, -fc_bound, fc_bound)
    return params


if __name__ == "__main__":
    input_dim, hidden_dim, num_layers, output_dim = 8, 32, 2, 4
    batch, seq = 2, 8

    key = jax.random.PRNGKey(0)
    pkey, xkey = jax.random.split(key)
    params = init_params(pkey, input_dim, hidden_dim, num_layers, output_dim)
    x = jax.random.normal(xkey, (batch, seq, input_dim), jnp.float32)

    out = lstm_forward(params, x)
    jax.block_until_ready(out)
    assert out.shape == (batch, output_dim)
    assert bool(jnp.all(jnp.isfinite(out)))
    print("KERNEL_OK")
</pallas_src>

<mosaic_0001>
module attributes {stable_mosaic.version = 11 : i64} {
  func.func @kernel(%arg0: memref<64x8xbf16, #tpu.memory_space<vmem>>, %arg1: memref<8x128xbf16, #tpu.memory_space<vmem>>, %arg2: memref<32x128xbf16, #tpu.memory_space<vmem>>, %arg3: memref<1x128xf32, #tpu.memory_space<vmem>>, %arg4: memref<32x128xbf16, #tpu.memory_space<vmem>>, %arg5: memref<32x128xbf16, #tpu.memory_space<vmem>>, %arg6: memref<1x128xf32, #tpu.memory_space<vmem>>, %arg7: memref<32x128xbf16, #tpu.memory_space<vmem>>, %arg8: memref<1x128xf32, #tpu.memory_space<vmem>>, %arg9: memref<8x128xf32, #tpu.memory_space<vmem>>, %arg10: memref<64x128xf32, #tpu.memory_space<vmem>>, %arg11: memref<64x32xf32, #tpu.memory_space<vmem>>) attributes {dimension_semantics = [], scalar_prefetch = 0 : i64, scratch_operands = 2 : i64, tpu.core_type = #tpu.core_type<tc>} {
    %0 = tpu.iota {dimensions = array<i32: 1>} : vector<8x128xi32>
    %c64_i32 = arith.constant 64 : i32
    %1 = vector.broadcast %c64_i32 : i32 to vector<8x128xi32>
    %2 = arith.cmpi sge, %0, %1 : vector<8x128xi32>
    %c96_i32 = arith.constant 96 : i32
    %3 = vector.broadcast %c96_i32 : i32 to vector<8x128xi32>
    %4 = arith.cmpi slt, %0, %3 : vector<8x128xi32>
    %5 = arith.andi %2, %4 : vector<8x128xi1>
    %cst = arith.constant 1.000000e+00 : f32
    %cst_0 = arith.constant 5.000000e-01 : f32
    %6 = vector.broadcast %cst : f32 to vector<8x128xf32>
    %7 = vector.broadcast %cst_0 : f32 to vector<8x128xf32>
    %8 = arith.select %5, %6, %7 : vector<8x128xi1>, vector<8x128xf32>
    %c0 = arith.constant 0 : index
    %c0_1 = arith.constant 0 : index
    %9 = vector.load %arg0[%c0, %c0_1] : memref<64x8xbf16, #tpu.memory_space<vmem>>, vector<64x8xbf16>
    %c0_2 = arith.constant 0 : index
    %c0_3 = arith.constant 0 : index
    %10 = vector.load %arg1[%c0_2, %c0_3] : memref<8x128xbf16, #tpu.memory_space<vmem>>, vector<8x128xbf16>
    %c0_4 = arith.constant 0 : index
    %c0_5 = arith.constant 0 : index
    %11 = vector.load %arg2[%c0_4, %c0_5] : memref<32x128xbf16, #tpu.memory_space<vmem>>, vector<32x128xbf16>
    %c0_6 = arith.constant 0 : index
    %c0_7 = arith.constant 0 : index
    %12 = vector.load %arg3[%c0_6, %c0_7] : memref<1x128xf32, #tpu.memory_space<vmem>>, vector<1x128xf32>
    %cst_8 = arith.constant dense<0.000000e+00> : vector<64x128xf32>
    %13 = tpu.matmul %9, %10, %cst_8 {dimension_numbers = #tpu.dot_dimension_numbers<[1], [0], [0], [1], [0, 0, 1, 1], [], []>} : vector<64x8xbf16>, vector<8x128xbf16>, vector<64x128xf32> -> vector<64x128xf32>
    %14 = vector.broadcast %12 : vector<1x128xf32> to vector<64x128xf32>
    %15 = arith.addf %13, %14 : vector<64x128xf32>
    %c0_9 = arith.constant 0 : index
    %c0_10 = arith.constant 0 : index
    %16 = vector.load %arg10[%c0_9, %c0_10] : memref<64x128xf32, #tpu.memory_space<vmem>>, vector<64x128xf32>
    tpu.vector_store %arg10[%c0_9, %c0_10], %15 {strides = array<i32>} : memref<64x128xf32, #tpu.memory_space<vmem>>, vector<64x128xf32>,
    %cst_11 = arith.constant 0.000000e+00 : f32
    %17 = vector.broadcast %cst_11 : f32 to vector<8x32xf32>
    %cst_12 = arith.constant 0.000000e+00 : f32
    %18 = vector.broadcast %cst_12 : f32 to vector<8x32xf32>
    %c0_i32 = arith.constant 0 : i32
    %c8_i32 = arith.constant 8 : i32
    %19 = arith.muli %c0_i32, %c8_i32 : i32
    %20 = tpu.assume_multiple %19, 8 : i32
    %21 = arith.index_cast %20 : i32 to index
    %c0_13 = arith.constant 0 : index
    %22 = vector.load %arg10[%21, %c0_13] : memref<64x128xf32, #tpu.memory_space<vmem>>, vector<8x128xf32>
    %23 = arith.truncf %17 : vector<8x32xf32> to vector<8x32xbf16>
    %cst_14 = arith.constant dense<0.000000e+00> : vector<8x128xf32>
    %24 = tpu.matmul %23, %11, %cst_14 {dimension_numbers = #tpu.dot_dimension_numbers<[1], [0], [0], [1], [0, 0, 1, 1], [], []>} : vector<8x32xbf16>, vector<32x128xbf16>, vector<8x128xf32> -> vector<8x128xf32>
    %25 = arith.addf %22, %24 : vector<8x128xf32>
    %26 = arith.mulf %25, %8 : vector<8x128xf32>
    %27 = math.tanh %26 : vector<8x128xf32>
    %cst_15 = arith.constant 1.000000e+00 : f32
    %28 = vector.broadcast %cst_15 : f32 to vector<8x128xf32>
    %29 = arith.addf %27, %28 : vector<8x128xf32>
    %cst_16 = arith.constant 5.000000e-01 : f32
    %30 = vector.broadcast %cst_16 : f32 to vector<8x128xf32>
    %31 = arith.mulf %30, %29 : vector<8x128xf32>
    %32 = arith.select %5, %27, %31 : vector<8x128xi1>, vector<8x128xf32>
    %33 = vector.extract_strided_slice %32 {offsets = [0, 0], sizes = [8, 32], strides = [1, 1]} : vector<8x128xf32> to vector<8x32xf32>
    %34 = vector.extract_strided_slice %32 {offsets = [0, 32], sizes = [8, 32], strides = [1, 1]} : vector<8x128xf32> to vector<8x32xf32>
    %35 = vector.extract_strided_slice %32 {offsets = [0, 64], sizes = [8, 32], strides = [1, 1]} : vector<8x128xf32> to vector<8x32xf32>
    %36 = vector.extract_strided_slice %32 {offsets = [0, 96], sizes = [8, 32], strides = [1, 1]} : vector<8x128xf32> to vector<8x32xf32>
    %37 = arith.mulf %34, %18 : vector<8x32xf32>
    %38 = arith.mulf %33, %35 : vector<8x32xf32>
    %39 = arith.addf %37, %38 : vector<8x32xf32>
    %40 = math.tanh %39 : vector<8x32xf32>
    %41 = arith.mulf %36, %40 : vector<8x32xf32>
    %42 = arith.index_cast %20 : i32 to index
    %c0_17 = arith.constant 0 : index
    %43 = vector.load %arg11[%42, %c0_17] : memref<64x32xf32, #tpu.memory_space<vmem>>, vector<8x32xf32>
    tpu.vector_store %arg11[%42, %c0_17], %41 {strides = array<i32>} : memref<64x32xf32, #tpu.memory_space<vmem>>, vector<8x32xf32>,
    %c1_i32 = arith.constant 1 : i32
    %c8_i32_18 = arith.constant 8 : i32
    %44 = arith.muli %c1_i32, %c8_i32_18 : i32
    %45 = tpu.assume_multiple %44, 8 : i32
    %46 = arith.index_cast %45 : i32 to index
    %c0_19 = arith.constant 0 : index
    %47 = vector.load %arg10[%46, %c0_19] : memref<64x128xf32, #tpu.memory_space<vmem>>, vector<8x128xf32>
    %48 = arith.truncf %41 : vector<8x32xf32> to vector<8x32xbf16>
    %cst_20 = arith.constant dense<0.000000e+00> : vector<8x128xf32>
    %49 = tpu.matmul %48, %11, %cst_20 {dimension_numbers = #tpu.dot_dimension_numbers<[1], [0], [0], [1], [0, 0, 1, 1], [], []>} : vector<8x32xbf16>, vector<32x128xbf16>, vector<8x128xf32> -> vector<8x128xf32>
    %50 = arith.addf %47, %49 : vector<8x128xf32>
    %51 = arith.mulf %50, %8 : vector<8x128xf32>
    %52 = math.tanh %51 : vector<8x128xf32>
    %cst_21 = arith.constant 1.000000e+00 : f32
    %53 = vector.broadcast %cst_21 : f32 to vector<8x128xf32>
    %54 = arith.addf %52, %53 : vector<8x128xf32>
    %cst_22 = arith.constant 5.000000e-01 : f32
    %55 = vector.broadcast %cst_22 : f32 to vector<8x128xf32>
    %56 = arith.mulf %55, %54 : vector<8x128xf32>
    %57 = arith.select %5, %52, %56 : vector<8x128xi1>, vector<8x128xf32>
    %58 = vector.extract_strided_slice %57 {offsets = [0, 0], sizes = [8, 32], strides = [1, 1]} : vector<8x128xf32> to vector<8x32xf32>
    %59 = vector.extract_strided_slice %57 {offsets = [0, 32], sizes = [8, 32], strides = [1, 1]} : vector<8x128xf32> to vector<8x32xf32>
    %60 = vector.extract_strided_slice %57 {offsets = [0, 64], sizes = [8, 32], strides = [1, 1]} : vector<8x128xf32> to vector<8x32xf32>
    %61 = vector.extract_strided_slice %57 {offsets = [0, 96], sizes = [8, 32], strides = [1, 1]} : vector<8x128xf32> to vector<8x32xf32>
    %62 = arith.mulf %59, %39 : vector<8x32xf32>
    %63 = arith.mulf %58, %60 : vector<8x32xf32>
    %64 = arith.addf %62, %63 : vector<8x32xf32>
    %65 = math.tanh %64 : vector<8x32xf32>
    %66 = arith.mulf %61, %65 : vector<8x32xf32>
    %67 = arith.index_cast %45 : i32 to index
    %c0_23 = arith.constant 0 : index
    %68 = vector.load %arg11[%67, %c0_23] : memref<64x32xf32, #tpu.memory_space<vmem>>, vector<8x32xf32>
    tpu.vector_store %arg11[%67, %c0_23], %66 {strides = array<i32>} : memref<64x32xf32, #tpu.memory_space<vmem>>, vector<8x32xf32>,
    %c2_i32 = arith.constant 2 : i32
    %c8_i32_24 = arith.constant 8 : i32
    %69 = arith.muli %c2_i32, %c8_i32_24 : i32
    %70 = tpu.assume_multiple %69, 8 : i32
    %71 = arith.index_cast %70 : i32 to index
    %c0_25 = arith.constant 0 : index
    %72 = vector.load %arg10[%71, %c0_25] : memref<64x128xf32, #tpu.memory_space<vmem>>, vector<8x128xf32>
    %73 = arith.truncf %66 : vector<8x32xf32> to vector<8x32xbf16>
    %cst_26 = arith.constant dense<0.000000e+00> : vector<8x128xf32>
    %74 = tpu.matmul %73, %11, %cst_26 {dimension_numbers = #tpu.dot_dimension_numbers<[1], [0], [0], [1], [0, 0, 1, 1], [], []>} : vector<8x32xbf16>, vector<32x128xbf16>, vector<8x128xf32> -> vector<8x128xf32>
    %75 = arith.addf %72, %74 : vector<8x128xf32>
    %76 = arith.mulf %75, %8 : vector<8x128xf32>
    %77 = math.tanh %76 : vector<8x128xf32>
    %cst_27 = arith.constant 1.000000e+00 : f32
    %78 = vector.broadcast %cst_27 : f32 to vector<8x128xf32>
    %79 = arith.addf %77, %78 : vector<8x128xf32>
    %cst_28 = arith.constant 5.000000e-01 : f32
    %80 = vector.broadcast %cst_28 : f32 to vector<8x128xf32>
    %81 = arith.mulf %80, %79 : vector<8x128xf32>
    %82 = arith.select %5, %77, %81 : vector<8x128xi1>, vector<8x128xf32>
    %83 = vector.extract_strided_slice %82 {offsets = [0, 0], sizes = [8, 32], strides = [1, 1]} : vector<8x128xf32> to vector<8x32xf32>
    %84 = vector.extract_strided_slice %82 {offsets = [0, 32], sizes = [8, 32], strides = [1, 1]} : vector<8x128xf32> to vector<8x32xf32>
    %85 = vector.extract_strided_slice %82 {offsets = [0, 64], sizes = [8, 32], strides = [1, 1]} : vector<8x128xf32> to vector<8x32xf32>
    %86 = vector.extract_strided_slice %82 {offsets = [0, 96], sizes = [8, 32], strides = [1, 1]} : vector<8x128xf32> to vector<8x32xf32>
    %87 = arith.mulf %84, %64 : vector<8x32xf32>
    %88 = arith.mulf %83, %85 : vector<8x32xf32>
    %89 = arith.addf %87, %88 : vector<8x32xf32>
    %90 = math.tanh %89 : vector<8x32xf32>
    %91 = arith.mulf %86, %90 : vector<8x32xf32>
    %92 = arith.index_cast %70 : i32 to index
    %c0_29 = arith.constant 0 : index
    %93 = vector.load %arg11[%92, %c0_29] : memref<64x32xf32, #tpu.memory_space<vmem>>, vector<8x32xf32>
    tpu.vector_store %arg11[%92, %c0_29], %91 {strides = array<i32>} : memref<64x32xf32, #tpu.memory_space<vmem>>, vector<8x32xf32>,
    %c3_i32 = arith.constant 3 : i32
    %c8_i32_30 = arith.constant 8 : i32
    %94 = arith.muli %c3_i32, %c8_i32_30 : i32
    %95 = tpu.assume_multiple %94, 8 : i32
    %96 = arith.index_cast %95 : i32 to index
    %c0_31 = arith.constant 0 : index
    %97 = vector.load %arg10[%96, %c0_31] : memref<64x128xf32, #tpu.memory_space<vmem>>, vector<8x128xf32>
    %98 = arith.truncf %91 : vector<8x32xf32> to vector<8x32xbf16>
    %cst_32 = arith.constant dense<0.000000e+00> : vector<8x128xf32>
    %99 = tpu.matmul %98, %11, %cst_32 {dimension_numbers = #tpu.dot_dimension_numbers<[1], [0], [0], [1], [0, 0, 1, 1], [], []>} : vector<8x32xbf16>, vector<32x128xbf16>, vector<8x128xf32> -> vector<8x128xf32>
    %100 = arith.addf %97, %99 : vector<8x128xf32>
    %101 = arith.mulf %100, %8 : vector<8x128xf32>
    %102 = math.tanh %101 : vector<8x128xf32>
    %cst_33 = arith.constant 1.000000e+00 : f32
    %103 = vector.broadcast %cst_33 : f32 to vector<8x128xf32>
    %104 = arith.addf %102, %103 : vector<8x128xf32>
    %cst_34 = arith.constant 5.000000e-01 : f32
    %105 = vector.broadcast %cst_34 : f32 to vector<8x128xf32>
    %106 = arith.mulf %105, %104 : vector<8x128xf32>
    %107 = arith.select %5, %102, %106 : vector<8x128xi1>, vector<8x128xf32>
    %108 = vector.extract_strided_slice %107 {offsets = [0, 0], sizes = [8, 32], strides = [1, 1]} : vector<8x128xf32> to vector<8x32xf32>
    %109 = vector.extract_strided_slice %107 {offsets = [0, 32], sizes = [8, 32], strides = [1, 1]} : vector<8x128xf32> to vector<8x32xf32>
    %110 = vector.extract_strided_slice %107 {offsets = [0, 64], sizes = [8, 32], strides = [1, 1]} : vector<8x128xf32> to vector<8x32xf32>
    %111 = vector.extract_strided_slice %107 {offsets = [0, 96], sizes = [8, 32], strides = [1, 1]} : vector<8x128xf32> to vector<8x32xf32>
    %112 = arith.mulf %109, %89 : vector<8x32xf32>
    %113 = arith.mulf %108, %110 : vector<8x32xf32>
    %114 = arith.addf %112, %113 : vector<8x32xf32>
    %115 = math.tanh %114 : vector<8x32xf32>
    %116 = arith.mulf %111, %115 : vector<8x32xf32>
    %117 = arith.index_cast %95 : i32 to index
    %c0_35 = arith.constant 0 : index
    %118 = vector.load %arg11[%117, %c0_35] : memref<64x32xf32, #tpu.memory_space<vmem>>, vector<8x32xf32>
    tpu.vector_store %arg11[%117, %c0_35], %116 {strides = array<i32>} : memref<64x32xf32, #tpu.memory_space<vmem>>, vector<8x32xf32>,
    %c4_i32 = arith.constant 4 : i32
    %c8_i32_36 = arith.constant 8 : i32
    %119 = arith.muli %c4_i32, %c8_i32_36 : i32
    %120 = tpu.assume_multiple %119, 8 : i32
    %121 = arith.index_cast %120 : i32 to index
    %c0_37 = arith.constant 0 : index
    %122 = vector.load %arg10[%121, %c0_37] : memref<64x128xf32, #tpu.memory_space<vmem>>, vector<8x128xf32>
    %123 = arith.truncf %116 : vector<8x32xf32> to vector<8x32xbf16>
    %cst_38 = arith.constant dense<0.000000e+00> : vector<8x128xf32>
    %124 = tpu.matmul %123, %11, %cst_38 {dimension_numbers = #tpu.dot_dimension_numbers<[1], [0], [0], [1], [0, 0, 1, 1], [], []>} : vector<8x32xbf16>, vector<32x128xbf16>, vector<8x128xf32> -> vector<8x128xf32>
    %125 = arith.addf %122, %124 : vector<8x128xf32>
    %126 = arith.mulf %125, %8 : vector<8x128xf32>
    %127 = math.tanh %126 : vector<8x128xf32>
    %cst_39 = arith.constant 1.000000e+00 : f32
    %128 = vector.broadcast %cst_39 : f32 to vector<8x128xf32>
    %129 = arith.addf %127, %128 : vector<8x128xf32>
    %cst_40 = arith.constant 5.000000e-01 : f32
    %130 = vector.broadcast %cst_40 : f32 to vector<8x128xf32>
    %131 = arith.mulf %130, %129 : vector<8x128xf32>
    %132 = arith.select %5, %127, %131 : vector<8x128xi1>, vector<8x128xf32>
    %133 = vector.extract_strided_slice %132 {offsets = [0, 0], sizes = [8, 32], strides = [1, 1]} : vector<8x128xf32> to vector<8x32xf32>
    %134 = vector.extract_strided_slice %132 {offsets = [0, 32], sizes = [8, 32], strides = [1, 1]} : vector<8x128xf32> to vector<8x32xf32>
    %135 = vector.extract_strided_slice %132 {offsets = [0, 64], sizes = [8, 32], strides = [1, 1]} : vector<8x128xf32> to vector<8x32xf32>
    %136 = vector.extract_strided_slice %132 {offsets = [0, 96], sizes = [8, 32], strides = [1, 1]} : vector<8x128xf32> to vector<8x32xf32>
    %137 = arith.mulf %134, %114 : vector<8x32xf32>
    %138 = arith.mulf %133, %135 : vector<8x32xf32>
    %139 = arith.addf %137, %138 : vector<8x32xf32>
    %140 = math.tanh %139 : vector<8x32xf32>
    %141 = arith.mulf %136, %140 : vector<8x32xf32>
    %142 = arith.index_cast %120 : i32 to index
    %c0_41 = arith.constant 0 : index
    %143 = vector.load %arg11[%142, %c0_41] : memref<64x32xf32, #tpu.memory_space<vmem>>, vector<8x32xf32>
    tpu.vector_store %arg11[%142, %c0_41], %141 {strides = array<i32>} : memref<64x32xf32, #tpu.memory_space<vmem>>, vector<8x32xf32>,
    %c5_i32 = arith.constant 5 : i32
    %c8_i32_42 = arith.constant 8 : i32
    %144 = arith.muli %c5_i32, %c8_i32_42 : i32
    %145 = tpu.assume_multiple %144, 8 : i32
    %146 = arith.index_cast %145 : i32 to index
    %c0_43 = arith.constant 0 : index
    %147 = vector.load %arg10[%146, %c0_43] : memref<64x128xf32, #tpu.memory_space<vmem>>, vector<8x128xf32>
    %148 = arith.truncf %141 : vector<8x32xf32> to vector<8x32xbf16>
    %cst_44 = arith.constant dense<0.000000e+00> : vector<8x128xf32>
    %149 = tpu.matmul %148, %11, %cst_44 {dimension_numbers = #tpu.dot_dimension_numbers<[1], [0], [0], [1], [0, 0, 1, 1], [], []>} : vector<8x32xbf16>, vector<32x128xbf16>, vector<8x128xf32> -> vector<8x128xf32>
    %150 = arith.addf %147, %149 : vector<8x128xf32>
    %151 = arith.mulf %150, %8 : vector<8x128xf32>
    %152 = math.tanh %151 : vector<8x128xf32>
    %cst_45 = arith.constant 1.000000e+00 : f32
    %153 = vector.broadcast %cst_45 : f32 to vector<8x128xf32>
    %154 = arith.addf %152, %153 : vector<8x128xf32>
    %cst_46 = arith.constant 5.000000e-01 : f32
    %155 = vector.broadcast %cst_46 : f32 to vector<8x128xf32>
    %156 = arith.mulf %155, %154 : vector<8x128xf32>
    %157 = arith.select %5, %152, %156 : vector<8x128xi1>, vector<8x128xf32>
    %158 = vector.extract_strided_slice %157 {offsets = [0, 0], sizes = [8, 32], strides = [1, 1]} : vector<8x128xf32> to vector<8x32xf32>
    %159 = vector.extract_strided_slice %157 {offsets = [0, 32], sizes = [8, 32], strides = [1, 1]} : vector<8x128xf32> to vector<8x32xf32>
    %160 = vector.extract_strided_slice %157 {offsets = [0, 64], sizes = [8, 32], strides = [1, 1]} : vector<8x128xf32> to vector<8x32xf32>
    %161 = vector.extract_strided_slice %157 {offsets = [0, 96], sizes = [8, 32], strides = [1, 1]} : vector<8x128xf32> to vector<8x32xf32>
    %162 = arith.mulf %159, %139 : vector<8x32xf32>
    %163 = arith.mulf %158, %160 : vector<8x32xf32>
    %164 = arith.addf %162, %163 : vector<8x32xf32>
    %165 = math.tanh %164 : vector<8x32xf32>
    %166 = arith.mulf %161, %165 : vector<8x32xf32>
    %167 = arith.index_cast %145 : i32 to index
    %c0_47 = arith.constant 0 : index
    %168 = vector.load %arg11[%167, %c0_47] : memref<64x32xf32, #tpu.memory_space<vmem>>, vector<8x32xf32>
    tpu.vector_store %arg11[%167, %c0_47], %166 {strides = array<i32>} : memref<64x32xf32, #tpu.memory_space<vmem>>, vector<8x32xf32>,
    %c6_i32 = arith.constant 6 : i32
    %c8_i32_48 = arith.constant 8 : i32
    %169 = arith.muli %c6_i32, %c8_i32_48 : i32
    %170 = tpu.assume_multiple %169, 8 : i32
    %171 = arith.index_cast %170 : i32 to index
    %c0_49 = arith.constant 0 : index
    %172 = vector.load %arg10[%171, %c0_49] : memref<64x128xf32, #tpu.memory_space<vmem>>, vector<8x128xf32>
    %173 = arith.truncf %166 : vector<8x32xf32> to vector<8x32xbf16>
    %cst_50 = arith.constant dense<0.000000e+00> : vector<8x128xf32>
    %174 = tpu.matmul %173, %11, %cst_50 {dimension_numbers = #tpu.dot_dimension_numbers<[1], [0], [0], [1], [0, 0, 1, 1], [], []>} : vector<8x32xbf16>, vector<32x128xbf16>, vector<8x128xf32> -> vector<8x128xf32>
    %175 = arith.addf %172, %174 : vector<8x128xf32>
    %176 = arith.mulf %175, %8 : vector<8x128xf32>
    %177 = math.tanh %176 : vector<8x128xf32>
    %cst_51 = arith.constant 1.000000e+00 : f32
    %178 = vector.broadcast %cst_51 : f32 to vector<8x128xf32>
    %179 = arith.addf %177, %178 : vector<8x128xf32>
    %cst_52 = arith.constant 5.000000e-01 : f32
    %180 = vector.broadcast %cst_52 : f32 to vector<8x128xf32>
    %181 = arith.mulf %180, %179 : vector<8x128xf32>
    %182 = arith.select %5, %177, %181 : vector<8x128xi1>, vector<8x128xf32>
    %183 = vector.extract_strided_slice %182 {offsets = [0, 0], sizes = [8, 32], strides = [1, 1]} : vector<8x128xf32> to vector<8x32xf32>
    %184 = vector.extract_strided_slice %182 {offsets = [0, 32], sizes = [8, 32], strides = [1, 1]} : vector<8x128xf32> to vector<8x32xf32>
    %185 = vector.extract_strided_slice %182 {offsets = [0, 64], sizes = [8, 32], strides = [1, 1]} : vector<8x128xf32> to vector<8x32xf32>
    %186 = vector.extract_strided_slice %182 {offsets = [0, 96], sizes = [8, 32], strides = [1, 1]} : vector<8x128xf32> to vector<8x32xf32>
    %187 = arith.mulf %184, %164 : vector<8x32xf32>
    %188 = arith.mulf %183, %185 : vector<8x32xf32>
    %189 = arith.addf %187, %188 : vector<8x32xf32>
    %190 = math.tanh %189 : vector<8x32xf32>
    %191 = arith.mulf %186, %190 : vector<8x32xf32>
    %192 = arith.index_cast %170 : i32 to index
    %c0_53 = arith.constant 0 : index
    %193 = vector.load %arg11[%192, %c0_53] : memref<64x32xf32, #tpu.memory_space<vmem>>, vector<8x32xf32>
    tpu.vector_store %arg11[%192, %c0_53], %191 {strides = array<i32>} : memref<64x32xf32, #tpu.memory_space<vmem>>, vector<8x32xf32>,
    %c7_i32 = arith.constant 7 : i32
    %c8_i32_54 = arith.constant 8 : i32
    %194 = arith.muli %c7_i32, %c8_i32_54 : i32
    %195 = tpu.assume_multiple %194, 8 : i32
    %196 = arith.index_cast %195 : i32 to index
    %c0_55 = arith.constant 0 : index
    %197 = vector.load %arg10[%196, %c0_55] : memref<64x128xf32, #tpu.memory_space<vmem>>, vector<8x128xf32>
    %198 = arith.truncf %191 : vector<8x32xf32> to vector<8x32xbf16>
    %cst_56 = arith.constant dense<0.000000e+00> : vector<8x128xf32>
    %199 = tpu.matmul %198, %11, %cst_56 {dimension_numbers = #tpu.dot_dimension_numbers<[1], [0], [0], [1], [0, 0, 1, 1], [], []>} : vector<8x32xbf16>, vector<32x128xbf16>, vector<8x128xf32> -> vector<8x128xf32>
    %200 = arith.addf %197, %199 : vector<8x128xf32>
    %201 = arith.mulf %200, %8 : vector<8x128xf32>
    %202 = math.tanh %201 : vector<8x128xf32>
    %cst_57 = arith.constant 1.000000e+00 : f32
    %203 = vector.broadcast %cst_57 : f32 to vector<8x128xf32>
    %204 = arith.addf %202, %203 : vector<8x128xf32>
    %cst_58 = arith.constant 5.000000e-01 : f32
    %205 = vector.broadcast %cst_58 : f32 to vector<8x128xf32>
    %206 = arith.mulf %205, %204 : vector<8x128xf32>
    %207 = arith.select %5, %202, %206 : vector<8x128xi1>, vector<8x128xf32>
    %208 = vector.extract_strided_slice %207 {offsets = [0, 0], sizes = [8, 32], strides = [1, 1]} : vector<8x128xf32> to vector<8x32xf32>
    %209 = vector.extract_strided_slice %207 {offsets = [0, 32], sizes = [8, 32], strides = [1, 1]} : vector<8x128xf32> to vector<8x32xf32>
    %210 = vector.extract_strided_slice %207 {offsets = [0, 64], sizes = [8, 32], strides = [1, 1]} : vector<8x128xf32> to vector<8x32xf32>
    %211 = vector.extract_strided_slice %207 {offsets = [0, 96], sizes = [8, 32], strides = [1, 1]} : vector<8x128xf32> to vector<8x32xf32>
    %212 = arith.mulf %209, %189 : vector<8x32xf32>
    %213 = arith.mulf %208, %210 : vector<8x32xf32>
    %214 = arith.addf %212, %213 : vector<8x32xf32>
    %215 = math.tanh %214 : vector<8x32xf32>
    %216 = arith.mulf %211, %215 : vector<8x32xf32>
    %217 = arith.index_cast %195 : i32 to index
    %c0_59 = arith.constant 0 : index
    %218 = vector.load %arg11[%217, %c0_59] : memref<64x32xf32, #tpu.memory_space<vmem>>, vector<8x32xf32>
    tpu.vector_store %arg11[%217, %c0_59], %216 {strides = array<i32>} : memref<64x32xf32, #tpu.memory_space<vmem>>, vector<8x32xf32>,
    %c8_i32_60 = arith.constant 8 : i32
    %c0_61 = arith.constant 0 : index
    %c0_62 = arith.constant 0 : index
    %219 = vector.load %arg11[%c0_61, %c0_62] : memref<64x32xf32, #tpu.memory_space<vmem>>, vector<64x32xf32>
    %220 = arith.truncf %219 : vector<64x32xf32> to vector<64x32xbf16>
    %c0_63 = arith.constant 0 : index
    %c0_64 = arith.constant 0 : index
    %221 = vector.load %arg4[%c0_63, %c0_64] : memref<32x128xbf16, #tpu.memory_space<vmem>>, vector<32x128xbf16>
    %c0_65 = arith.constant 0 : index
    %c0_66 = arith.constant 0 : index
    %222 = vector.load %arg5[%c0_65, %c0_66] : memref<32x128xbf16, #tpu.memory_space<vmem>>, vector<32x128xbf16>
    %c0_67 = arith.constant 0 : index
    %c0_68 = arith.constant 0 : index
    %223 = vector.load %arg6[%c0_67, %c0_68] : memref<1x128xf32, #tpu.memory_space<vmem>>, vector<1x128xf32>
    %cst_69 = arith.constant dense<0.000000e+00> : vector<64x128xf32>
    %224 = tpu.matmul %220, %221, %cst_69 {dimension_numbers = #tpu.dot_dimension_numbers<[1], [0], [0], [1], [0, 0, 1, 1], [], []>} : vector<64x32xbf16>, vector<32x128xbf16>, vector<64x128xf32> -> vector<64x128xf32>
    %225 = vector.broadcast %223 : vector<1x128xf32> to vector<64x128xf32>
    %226 = arith.addf %224, %225 : vector<64x128xf32>
    %c0_70 = arith.constant 0 : index
    %c0_71 = arith.constant 0 : index
    %227 = vector.load %arg10[%c0_70, %c0_71] : memref<64x128xf32, #tpu.memory_space<vmem>>, vector<64x128xf32>
    tpu.vector_store %arg10[%c0_70, %c0_71], %226 {strides = array<i32>} : memref<64x128xf32, #tpu.memory_space<vmem>>, vector<64x128xf32>,
    %cst_72 = arith.constant 0.000000e+00 : f32
    %228 = vector.broadcast %cst_72 : f32 to vector<8x32xf32>
    %cst_73 = arith.constant 0.000000e+00 : f32
    %229 = vector.broadcast %cst_73 : f32 to vector<8x32xf32>
    %c0_i32_74 = arith.constant 0 : i32
    %c8_i32_75 = arith.constant 8 : i32
    %230 = arith.muli %c0_i32_74, %c8_i32_75 : i32
    %231 = tpu.assume_multiple %230, 8 : i32
    %232 = arith.index_cast %231 : i32 to index
    %c0_76 = arith.constant 0 : index
    %233 = vector.load %arg10[%232, %c0_76] : memref<64x128xf32, #tpu.memory_space<vmem>>, vector<8x128xf32>
    %234 = arith.truncf %228 : vector<8x32xf32> to vector<8x32xbf16>
    %cst_77 = arith.constant dense<0.000000e+00> : vector<8x128xf32>
    %235 = tpu.matmul %234, %222, %cst_77 {dimension_numbers = #tpu.dot_dimension_numbers<[1], [0], [0], [1], [0, 0, 1, 1], [], []>} : vector<8x32xbf16>, vector<32x128xbf16>, vector<8x128xf32> -> vector<8x128xf32>
    %236 = arith.addf %233, %235 : vector<8x128xf32>
    %237 = arith.mulf %236, %8 : vector<8x128xf32>
    %238 = math.tanh %237 : vector<8x128xf32>
    %cst_78 = arith.constant 1.000000e+00 : f32
    %239 = vector.broadcast %cst_78 : f32 to vector<8x128xf32>
    %240 = arith.addf %238, %239 : vector<8x128xf32>
    %cst_79 = arith.constant 5.000000e-01 : f32
    %241 = vector.broadcast %cst_79 : f32 to vector<8x128xf32>
    %242 = arith.mulf %241, %240 : vector<8x128xf32>
    %243 = arith.select %5, %238, %242 : vector<8x128xi1>, vector<8x128xf32>
    %244 = vector.extract_strided_slice %243 {offsets = [0, 0], sizes = [8, 32], strides = [1, 1]} : vector<8x128xf32> to vector<8x32xf32>
    %245 = vector.extract_strided_slice %243 {offsets = [0, 32], sizes = [8, 32], strides = [1, 1]} : vector<8x128xf32> to vector<8x32xf32>
    %246 = vector.extract_strided_slice %243 {offsets = [0, 64], sizes = [8, 32], strides = [1, 1]} : vector<8x128xf32> to vector<8x32xf32>
    %247 = vector.extract_strided_slice %243 {offsets = [0, 96], sizes = [8, 32], strides = [1, 1]} : vector<8x128xf32> to vector<8x32xf32>
    %248 = arith.mulf %245, %229 : vector<8x32xf32>
    %249 = arith.mulf %244, %246 : vector<8x32xf32>
    %250 = arith.addf %248, %249 : vector<8x32xf32>
    %251 = math.tanh %250 : vector<8x32xf32>
    %252 = arith.mulf %247, %251 : vector<8x32xf32>
    %c1_i32_80 = arith.constant 1 : i32
    %c8_i32_81 = arith.constant 8 : i32
    %253 = arith.muli %c1_i32_80, %c8_i32_81 : i32
    %254 = tpu.assume_multiple %253, 8 : i32
    %255 = arith.index_cast %254 : i32 to index
    %c0_82 = arith.constant 0 : index
    %256 = vector.load %arg10[%255, %c0_82] : memref<64x128xf32, #tpu.memory_space<vmem>>, vector<8x128xf32>
    %257 = arith.truncf %252 : vector<8x32xf32> to vector<8x32xbf16>
    %cst_83 = arith.constant dense<0.000000e+00> : vector<8x128xf32>
    %258 = tpu.matmul %257, %222, %cst_83 {dimension_numbers = #tpu.dot_dimension_numbers<[1], [0], [0], [1], [0, 0, 1, 1], [], []>} : vector<8x32xbf16>, vector<32x128xbf16>, vector<8x128xf32> -> vector<8x128xf32>
    %259 = arith.addf %256, %258 : vector<8x128xf32>
    %260 = arith.mulf %259, %8 : vector<8x128xf32>
    %261 = math.tanh %260 : vector<8x128xf32>
    %cst_84 = arith.constant 1.000000e+00 : f32
    %262 = vector.broadcast %cst_84 : f32 to vector<8x128xf32>
    %263 = arith.addf %261, %262 : vector<8x128xf32>
    %cst_85 = arith.constant 5.000000e-01 : f32
    %264 = vector.broadcast %cst_85 : f32 to vector<8x128xf32>
    %265 = arith.mulf %264, %263 : vector<8x128xf32>
    %266 = arith.select %5, %261, %265 : vector<8x128xi1>, vector<8x128xf32>
    %267 = vector.extract_strided_slice %266 {offsets = [0, 0], sizes = [8, 32], strides = [1, 1]} : vector<8x128xf32> to vector<8x32xf32>
    %268 = vector.extract_strided_slice %266 {offsets = [0, 32], sizes = [8, 32], strides = [1, 1]} : vector<8x128xf32> to vector<8x32xf32>
    %269 = vector.extract_strided_slice %266 {offsets = [0, 64], sizes = [8, 32], strides = [1, 1]} : vector<8x128xf32> to vector<8x32xf32>
    %270 = vector.extract_strided_slice %266 {offsets = [0, 96], sizes = [8, 32], strides = [1, 1]} : vector<8x128xf32> to vector<8x32xf32>
    %271 = arith.mulf %268, %250 : vector<8x32xf32>
    %272 = arith.mulf %267, %269 : vector<8x32xf32>
    %273 = arith.addf %271, %272 : vector<8x32xf32>
    %274 = math.tanh %273 : vector<8x32xf32>
    %275 = arith.mulf %270, %274 : vector<8x32xf32>
    %c2_i32_86 = arith.constant 2 : i32
    %c8_i32_87 = arith.constant 8 : i32
    %276 = arith.muli %c2_i32_86, %c8_i32_87 : i32
    %277 = tpu.assume_multiple %276, 8 : i32
    %278 = arith.index_cast %277 : i32 to index
    %c0_88 = arith.constant 0 : index
    %279 = vector.load %arg10[%278, %c0_88] : memref<64x128xf32, #tpu.memory_space<vmem>>, vector<8x128xf32>
    %280 = arith.truncf %275 : vector<8x32xf32> to vector<8x32xbf16>
    %cst_89 = arith.constant dense<0.000000e+00> : vector<8x128xf32>
    %281 = tpu.matmul %280, %222, %cst_89 {dimension_numbers = #tpu.dot_dimension_numbers<[1], [0], [0], [1], [0, 0, 1, 1], [], []>} : vector<8x32xbf16>, vector<32x128xbf16>, vector<8x128xf32> -> vector<8x128xf32>
    %282 = arith.addf %279, %281 : vector<8x128xf32>
    %283 = arith.mulf %282, %8 : vector<8x128xf32>
    %284 = math.tanh %283 : vector<8x128xf32>
    %cst_90 = arith.constant 1.000000e+00 : f32
    %285 = vector.broadcast %cst_90 : f32 to vector<8x128xf32>
    %286 = arith.addf %284, %285 : vector<8x128xf32>
    %cst_91 = arith.constant 5.000000e-01 : f32
    %287 = vector.broadcast %cst_91 : f32 to vector<8x128xf32>
    %288 = arith.mulf %287, %286 : vector<8x128xf32>
    %289 = arith.select %5, %284, %288 : vector<8x128xi1>, vector<8x128xf32>
    %290 = vector.extract_strided_slice %289 {offsets = [0, 0], sizes = [8, 32], strides = [1, 1]} : vector<8x128xf32> to vector<8x32xf32>
    %291 = vector.extract_strided_slice %289 {offsets = [0, 32], sizes = [8, 32], strides = [1, 1]} : vector<8x128xf32> to vector<8x32xf32>
    %292 = vector.extract_strided_slice %289 {offsets = [0, 64], sizes = [8, 32], strides = [1, 1]} : vector<8x128xf32> to vector<8x32xf32>
    %293 = vector.extract_strided_slice %289 {offsets = [0, 96], sizes = [8, 32], strides = [1, 1]} : vector<8x128xf32> to vector<8x32xf32>
    %294 = arith.mulf %291, %273 : vector<8x32xf32>
    %295 = arith.mulf %290, %292 : vector<8x32xf32>
    %296 = arith.addf %294, %295 : vector<8x32xf32>
    %297 = math.tanh %296 : vector<8x32xf32>
    %298 = arith.mulf %293, %297 : vector<8x32xf32>
    %c3_i32_92 = arith.constant 3 : i32
    %c8_i32_93 = arith.constant 8 : i32
    %299 = arith.muli %c3_i32_92, %c8_i32_93 : i32
    %300 = tpu.assume_multiple %299, 8 : i32
    %301 = arith.index_cast %300 : i32 to index
    %c0_94 = arith.constant 0 : index
    %302 = vector.load %arg10[%301, %c0_94] : memref<64x128xf32, #tpu.memory_space<vmem>>, vector<8x128xf32>
    %303 = arith.truncf %298 : vector<8x32xf32> to vector<8x32xbf16>
    %cst_95 = arith.constant dense<0.000000e+00> : vector<8x128xf32>
    %304 = tpu.matmul %303, %222, %cst_95 {dimension_numbers = #tpu.dot_dimension_numbers<[1], [0], [0], [1], [0, 0, 1, 1], [], []>} : vector<8x32xbf16>, vector<32x128xbf16>, vector<8x128xf32> -> vector<8x128xf32>
    %305 = arith.addf %302, %304 : vector<8x128xf32>
    %306 = arith.mulf %305, %8 : vector<8x128xf32>
    %307 = math.tanh %306 : vector<8x128xf32>
    %cst_96 = arith.constant 1.000000e+00 : f32
    %308 = vector.broadcast %cst_96 : f32 to vector<8x128xf32>
    %309 = arith.addf %307, %308 : vector<8x128xf32>
    %cst_97 = arith.constant 5.000000e-01 : f32
    %310 = vector.broadcast %cst_97 : f32 to vector<8x128xf32>
    %311 = arith.mulf %310, %309 : vector<8x128xf32>
    %312 = arith.select %5, %307, %311 : vector<8x128xi1>, vector<8x128xf32>
    %313 = vector.extract_strided_slice %312 {offsets = [0, 0], sizes = [8, 32], strides = [1, 1]} : vector<8x128xf32> to vector<8x32xf32>
    %314 = vector.extract_strided_slice %312 {offsets = [0, 32], sizes = [8, 32], strides = [1, 1]} : vector<8x128xf32> to vector<8x32xf32>
    %315 = vector.extract_strided_slice %312 {offsets = [0, 64], sizes = [8, 32], strides = [1, 1]} : vector<8x128xf32> to vector<8x32xf32>
    %316 = vector.extract_strided_slice %312 {offsets = [0, 96], sizes = [8, 32], strides = [1, 1]} : vector<8x128xf32> to vector<8x32xf32>
    %317 = arith.mulf %314, %296 : vector<8x32xf32>
    %318 = arith.mulf %313, %315 : vector<8x32xf32>
    %319 = arith.addf %317, %318 : vector<8x32xf32>
    %320 = math.tanh %319 : vector<8x32xf32>
    %321 = arith.mulf %316, %320 : vector<8x32xf32>
    %c4_i32_98 = arith.constant 4 : i32
    %c8_i32_99 = arith.constant 8 : i32
    %322 = arith.muli %c4_i32_98, %c8_i32_99 : i32
    %323 = tpu.assume_multiple %322, 8 : i32
    %324 = arith.index_cast %323 : i32 to index
    %c0_100 = arith.constant 0 : index
    %325 = vector.load %arg10[%324, %c0_100] : memref<64x128xf32, #tpu.memory_space<vmem>>, vector<8x128xf32>
    %326 = arith.truncf %321 : vector<8x32xf32> to vector<8x32xbf16>
    %cst_101 = arith.constant dense<0.000000e+00> : vector<8x128xf32>
    %327 = tpu.matmul %326, %222, %cst_101 {dimension_numbers = #tpu.dot_dimension_numbers<[1], [0], [0], [1], [0, 0, 1, 1], [], []>} : vector<8x32xbf16>, vector<32x128xbf16>, vector<8x128xf32> -> vector<8x128xf32>
    %328 = arith.addf %325, %327 : vector<8x128xf32>
    %329 = arith.mulf %328, %8 : vector<8x128xf32>
    %330 = math.tanh %329 : vector<8x128xf32>
    %cst_102 = arith.constant 1.000000e+00 : f32
    %331 = vector.broadcast %cst_102 : f32 to vector<8x128xf32>
    %332 = arith.addf %330, %331 : vector<8x128xf32>
    %cst_103 = arith.constant 5.000000e-01 : f32
    %333 = vector.broadcast %cst_103 : f32 to vector<8x128xf32>
    %334 = arith.mulf %333, %332 : vector<8x128xf32>
    %335 = arith.select %5, %330, %334 : vector<8x128xi1>, vector<8x128xf32>
    %336 = vector.extract_strided_slice %335 {offsets = [0, 0], sizes = [8, 32], strides = [1, 1]} : vector<8x128xf32> to vector<8x32xf32>
    %337 = vector.extract_strided_slice %335 {offsets = [0, 32], sizes = [8, 32], strides = [1, 1]} : vector<8x128xf32> to vector<8x32xf32>
    %338 = vector.extract_strided_slice %335 {offsets = [0, 64], sizes = [8, 32], strides = [1, 1]} : vector<8x128xf32> to vector<8x32xf32>
    %339 = vector.extract_strided_slice %335 {offsets = [0, 96], sizes = [8, 32], strides = [1, 1]} : vector<8x128xf32> to vector<8x32xf32>
    %340 = arith.mulf %337, %319 : vector<8x32xf32>
    %341 = arith.mulf %336, %338 : vector<8x32xf32>
    %342 = arith.addf %340, %341 : vector<8x32xf32>
    %343 = math.tanh %342 : vector<8x32xf32>
    %344 = arith.mulf %339, %343 : vector<8x32xf32>
    %c5_i32_104 = arith.constant 5 : i32
    %c8_i32_105 = arith.constant 8 : i32
    %345 = arith.muli %c5_i32_104, %c8_i32_105 : i32
    %346 = tpu.assume_multiple %345, 8 : i32
    %347 = arith.index_cast %346 : i32 to index
    %c0_106 = arith.constant 0 : index
    %348 = vector.load %arg10[%347, %c0_106] : memref<64x128xf32, #tpu.memory_space<vmem>>, vector<8x128xf32>
    %349 = arith.truncf %344 : vector<8x32xf32> to vector<8x32xbf16>
    %cst_107 = arith.constant dense<0.000000e+00> : vector<8x128xf32>
    %350 = tpu.matmul %349, %222, %cst_107 {dimension_numbers = #tpu.dot_dimension_numbers<[1], [0], [0], [1], [0, 0, 1, 1], [], []>} : vector<8x32xbf16>, vector<32x128xbf16>, vector<8x128xf32> -> vector<8x128xf32>
    %351 = arith.addf %348, %350 : vector<8x128xf32>
    %352 = arith.mulf %351, %8 : vector<8x128xf32>
    %353 = math.tanh %352 : vector<8x128xf32>
    %cst_108 = arith.constant 1.000000e+00 : f32
    %354 = vector.broadcast %cst_108 : f32 to vector<8x128xf32>
    %355 = arith.addf %353, %354 : vector<8x128xf32>
    %cst_109 = arith.constant 5.000000e-01 : f32
    %356 = vector.broadcast %cst_109 : f32 to vector<8x128xf32>
    %357 = arith.mulf %356, %355 : vector<8x128xf32>
    %358 = arith.select %5, %353, %357 : vector<8x128xi1>, vector<8x128xf32>
    %359 = vector.extract_strided_slice %358 {offsets = [0, 0], sizes = [8, 32], strides = [1, 1]} : vector<8x128xf32> to vector<8x32xf32>
    %360 = vector.extract_strided_slice %358 {offsets = [0, 32], sizes = [8, 32], strides = [1, 1]} : vector<8x128xf32> to vector<8x32xf32>
    %361 = vector.extract_strided_slice %358 {offsets = [0, 64], sizes = [8, 32], strides = [1, 1]} : vector<8x128xf32> to vector<8x32xf32>
    %362 = vector.extract_strided_slice %358 {offsets = [0, 96], sizes = [8, 32], strides = [1, 1]} : vector<8x128xf32> to vector<8x32xf32>
    %363 = arith.mulf %360, %342 : vector<8x32xf32>
    %364 = arith.mulf %359, %361 : vector<8x32xf32>
    %365 = arith.addf %363, %364 : vector<8x32xf32>
    %366 = math.tanh %365 : vector<8x32xf32>
    %367 = arith.mulf %362, %366 : vector<8x32xf32>
    %c6_i32_110 = arith.constant 6 : i32
    %c8_i32_111 = arith.constant 8 : i32
    %368 = arith.muli %c6_i32_110, %c8_i32_111 : i32
    %369 = tpu.assume_multiple %368, 8 : i32
    %370 = arith.index_cast %369 : i32 to index
    %c0_112 = arith.constant 0 : index
    %371 = vector.load %arg10[%370, %c0_112] : memref<64x128xf32, #tpu.memory_space<vmem>>, vector<8x128xf32>
    %372 = arith.truncf %367 : vector<8x32xf32> to vector<8x32xbf16>
    %cst_113 = arith.constant dense<0.000000e+00> : vector<8x128xf32>
    %373 = tpu.matmul %372, %222, %cst_113 {dimension_numbers = #tpu.dot_dimension_numbers<[1], [0], [0], [1], [0, 0, 1, 1], [], []>} : vector<8x32xbf16>, vector<32x128xbf16>, vector<8x128xf32> -> vector<8x128xf32>
    %374 = arith.addf %371, %373 : vector<8x128xf32>
    %375 = arith.mulf %374, %8 : vector<8x128xf32>
    %376 = math.tanh %375 : vector<8x128xf32>
    %cst_114 = arith.constant 1.000000e+00 : f32
    %377 = vector.broadcast %cst_114 : f32 to vector<8x128xf32>
    %378 = arith.addf %376, %377 : vector<8x128xf32>
    %cst_115 = arith.constant 5.000000e-01 : f32
    %379 = vector.broadcast %cst_115 : f32 to vector<8x128xf32>
    %380 = arith.mulf %379, %378 : vector<8x128xf32>
    %381 = arith.select %5, %376, %380 : vector<8x128xi1>, vector<8x128xf32>
    %382 = vector.extract_strided_slice %381 {offsets = [0, 0], sizes = [8, 32], strides = [1, 1]} : vector<8x128xf32> to vector<8x32xf32>
    %383 = vector.extract_strided_slice %381 {offsets = [0, 32], sizes = [8, 32], strides = [1, 1]} : vector<8x128xf32> to vector<8x32xf32>
    %384 = vector.extract_strided_slice %381 {offsets = [0, 64], sizes = [8, 32], strides = [1, 1]} : vector<8x128xf32> to vector<8x32xf32>
    %385 = vector.extract_strided_slice %381 {offsets = [0, 96], sizes = [8, 32], strides = [1, 1]} : vector<8x128xf32> to vector<8x32xf32>
    %386 = arith.mulf %383, %365 : vector<8x32xf32>
    %387 = arith.mulf %382, %384 : vector<8x32xf32>
    %388 = arith.addf %386, %387 : vector<8x32xf32>
    %389 = math.tanh %388 : vector<8x32xf32>
    %390 = arith.mulf %385, %389 : vector<8x32xf32>
    %c7_i32_116 = arith.constant 7 : i32
    %c8_i32_117 = arith.constant 8 : i32
    %391 = arith.muli %c7_i32_116, %c8_i32_117 : i32
    %392 = tpu.assume_multiple %391, 8 : i32
    %393 = arith.index_cast %392 : i32 to index
    %c0_118 = arith.constant 0 : index
    %394 = vector.load %arg10[%393, %c0_118] : memref<64x128xf32, #tpu.memory_space<vmem>>, vector<8x128xf32>
    %395 = arith.truncf %390 : vector<8x32xf32> to vector<8x32xbf16>
    %cst_119 = arith.constant dense<0.000000e+00> : vector<8x128xf32>
    %396 = tpu.matmul %395, %222, %cst_119 {dimension_numbers = #tpu.dot_dimension_numbers<[1], [0], [0], [1], [0, 0, 1, 1], [], []>} : vector<8x32xbf16>, vector<32x128xbf16>, vector<8x128xf32> -> vector<8x128xf32>
    %397 = arith.addf %394, %396 : vector<8x128xf32>
    %398 = arith.mulf %397, %8 : vector<8x128xf32>
    %399 = math.tanh %398 : vector<8x128xf32>
    %cst_120 = arith.constant 1.000000e+00 : f32
    %400 = vector.broadcast %cst_120 : f32 to vector<8x128xf32>
    %401 = arith.addf %399, %400 : vector<8x128xf32>
    %cst_121 = arith.constant 5.000000e-01 : f32
    %402 = vector.broadcast %cst_121 : f32 to vector<8x128xf32>
    %403 = arith.mulf %402, %401 : vector<8x128xf32>
    %404 = arith.select %5, %399, %403 : vector<8x128xi1>, vector<8x128xf32>
    %405 = vector.extract_strided_slice %404 {offsets = [0, 0], sizes = [8, 32], strides = [1, 1]} : vector<8x128xf32> to vector<8x32xf32>
    %406 = vector.extract_strided_slice %404 {offsets = [0, 32], sizes = [8, 32], strides = [1, 1]} : vector<8x128xf32> to vector<8x32xf32>
    %407 = vector.extract_strided_slice %404 {offsets = [0, 64], sizes = [8, 32], strides = [1, 1]} : vector<8x128xf32> to vector<8x32xf32>
    %408 = vector.extract_strided_slice %404 {offsets = [0, 96], sizes = [8, 32], strides = [1, 1]} : vector<8x128xf32> to vector<8x32xf32>
    %409 = arith.mulf %406, %388 : vector<8x32xf32>
    %410 = arith.mulf %405, %407 : vector<8x32xf32>
    %411 = arith.addf %409, %410 : vector<8x32xf32>
    %412 = math.tanh %411 : vector<8x32xf32>
    %413 = arith.mulf %408, %412 : vector<8x32xf32>
    %c8_i32_122 = arith.constant 8 : i32
    %414 = arith.truncf %413 : vector<8x32xf32> to vector<8x32xbf16>
    %c0_123 = arith.constant 0 : index
    %c0_124 = arith.constant 0 : index
    %415 = vector.load %arg7[%c0_123, %c0_124] : memref<32x128xbf16, #tpu.memory_space<vmem>>, vector<32x128xbf16>
    %cst_125 = arith.constant dense<0.000000e+00> : vector<8x128xf32>
    %416 = tpu.matmul %414, %415, %cst_125 {dimension_numbers = #tpu.dot_dimension_numbers<[1], [0], [0], [1], [0, 0, 1, 1], [], []>} : vector<8x32xbf16>, vector<32x128xbf16>, vector<8x128xf32> -> vector<8x128xf32>
    %c0_126 = arith.constant 0 : index
    %c0_127 = arith.constant 0 : index
    %417 = vector.load %arg8[%c0_126, %c0_127] : memref<1x128xf32, #tpu.memory_space<vmem>>, vector<1x128xf32>
    %418 = vector.broadcast %417 : vector<1x128xf32> to vector<8x128xf32>
    %419 = arith.addf %416, %418 : vector<8x128xf32>
    %c0_128 = arith.constant 0 : index
    %c0_129 = arith.constant 0 : index
    %420 = vector.load %arg9[%c0_128, %c0_129] : memref<8x128xf32, #tpu.memory_space<vmem>>, vector<8x128xf32>
    tpu.vector_store %arg9[%c0_128, %c0_129], %419 {strides = array<i32>} : memref<8x128xf32, #tpu.memory_space<vmem>>, vector<8x128xf32>,
    return
  }
}

</mosaic_0001>

<llo_original>
// kernel: lstm_forward.1
$region0: #{lstm_forward.1}
  #allocation0 [shape = 'u32[]', space=smem, size = 0x4, offset = 0x4, fixed_abs, tag = 'smem constant byte address 0x4 - core index']
  #allocation1 [shape = 'u32[144,128]{1,0:T(1,128)}', space=vmem, size = 0x12000, scoped, tag = 'internal scratch']
  #allocation2 [shape = 'f32[64,128]{1,0:T(8,128)}', space=vmem, size = 0x8000, scoped, tag = 'scratch operand']
  #allocation3 [shape = 'f32[64,32]{1,0:T(8,128)}', space=vmem, size = 0x8000, scoped, tag = 'scratch operand']
  %s0 = inlined_call_operand.vmem [shape: bf16[64,8], index: 0, kind: input, shape index: {}]
  %s1 = inlined_call_operand.vmem [shape: bf16[8,128], index: 1, kind: input, shape index: {}]
  %s2 = inlined_call_operand.vmem [shape: bf16[32,128], index: 2, kind: input, shape index: {}]
  %s3 = inlined_call_operand.vmem [shape: f32[1,128], index: 3, kind: input, shape index: {}]
  %s4 = inlined_call_operand.vmem [shape: bf16[32,128], index: 4, kind: input, shape index: {}]
  %s5 = inlined_call_operand.vmem [shape: bf16[32,128], index: 5, kind: input, shape index: {}]
  %s6 = inlined_call_operand.vmem [shape: f32[1,128], index: 6, kind: input, shape index: {}]
  %s7 = inlined_call_operand.vmem [shape: bf16[32,128], index: 7, kind: input, shape index: {}]
  %s8 = inlined_call_operand.vmem [shape: f32[1,128], index: 8, kind: input, shape index: {}]
  %s9 = inlined_call_operand.vmem [shape: f32[8,128], index: 9, kind: output, shape index: {}]
  %s10 = sld [smem:[#allocation0]]
  $region46: #{lstm_forward.1} parent=0
    _
  %s12 = ssub.s32 1, %s10
  %s13 = scalar_select 0, %s12, %s10
  // Predicated region
  $region2: #{lstm_forward.1} parent=0 // pred_check
    _
  $region3: #{lstm_forward.1} parent=0 // pred_check_branch
    %15 = sbr.rel (0) target = $region5
  $region4: #{lstm_forward.1} parent=0 // pred_region
    _
  $region5: #{lstm_forward.1} parent=0 // pred_fallthru
    _
  // Predicated region
  $region6: #{lstm_forward.1} parent=0 // pred_check
    _
  $region7: #{lstm_forward.1} parent=0 // pred_check_branch
    %17 = sbr.rel (0) target = $region9
  $region8: #{lstm_forward.1} parent=0 // pred_region
    _
  $region9: #{lstm_forward.1} parent=0 // pred_fallthru
    _
  // Predicated region
  $region10: #{lstm_forward.1} parent=0 // pred_check
    _
  $region11: #{lstm_forward.1} parent=0 // pred_check_branch
    %19 = sbr.rel (0) target = $region13
  $region12: #{lstm_forward.1} parent=0 // pred_region
    _
  $region13: #{lstm_forward.1} parent=0 // pred_fallthru
    _
  // Predicated region
  $region14: #{lstm_forward.1} parent=0 // pred_check
    _
  $region15: #{lstm_forward.1} parent=0 // pred_check_branch
    %21 = sbr.rel (0) target = $region17
  $region16: #{lstm_forward.1} parent=0 // pred_region
    _
  $region17: #{lstm_forward.1} parent=0 // pred_fallthru
    _
  // Predicated region
  $region18: #{lstm_forward.1} parent=0 // pred_check
    _
  $region19: #{lstm_forward.1} parent=0 // pred_check_branch
    %23 = sbr.rel (0) target = $region21
  $region20: #{lstm_forward.1} parent=0 // pred_region
    _
  $region21: #{lstm_forward.1} parent=0 // pred_fallthru
    _
  // Predicated region
  $region22: #{lstm_forward.1} parent=0 // pred_check
    _
  $region23: #{lstm_forward.1} parent=0 // pred_check_branch
    %25 = sbr.rel (0) target = $region25
  $region24: #{lstm_forward.1} parent=0 // pred_region
    _
  $region25: #{lstm_forward.1} parent=0 // pred_fallthru
    _
  // Predicated region
  $region26: #{lstm_forward.1} parent=0 // pred_check
    _
  $region27: #{lstm_forward.1} parent=0 // pred_check_branch
    %27 = sbr.rel (0) target = $region29
  $region28: #{lstm_forward.1} parent=0 // pred_region
    _
  $region29: #{lstm_forward.1} parent=0 // pred_fallthru
    _
  // Predicated region
  $region30: #{lstm_forward.1} parent=0 // pred_check
    _
  $region31: #{lstm_forward.1} parent=0 // pred_check_branch
    %29 = sbr.rel (0) target = $region33
  $region32: #{lstm_forward.1} parent=0 // pred_region
    _
  $region33: #{lstm_forward.1} parent=0 // pred_fallthru
    _
  // Predicated region
  $region34: #{lstm_forward.1} parent=0 // pred_check
    _
  $region35: #{lstm_forward.1} parent=0 // pred_check_branch
    %31 = sbr.rel (0) target = $region37
  $region36: #{lstm_forward.1} parent=0 // pred_region
    _
  $region37: #{lstm_forward.1} parent=0 // pred_fallthru
    _
  %v33 = vlaneseq
  %v34 = vand.u32 %v33, 127
  %vm35 = vcmp.ge.s32.totalorder %v34, 64
  %vm36 = vcmp.lt.s32.totalorder %v34, 96
  %vm37 = vmand %vm35, %vm36
  %v38 = vsel %vm37, 1.0, 0.5
  %v39 = vld [vmem:[%s0] sm:$0xf]
  %v40 = vld [vmem:[%s0 + $0x4] sm:$0xf]
  %v41 = vld [vmem:[%s0 + $0x8] sm:$0xf]
  %v42 = vld [vmem:[%s0 + $0xc] sm:$0xf]
  %v43 = vld [vmem:[%s0 + $0x10] sm:$0xf]
  %v44 = vld [vmem:[%s0 + $0x14] sm:$0xf]
  %v45 = vld [vmem:[%s0 + $0x18] sm:$0xf]
  %v46 = vld [vmem:[%s0 + $0x1c] sm:$0xf]
  %v47 = vld [vmem:[%s1] sm:$0xf]
  %v48 = vld [vmem:[%s2] sm:$0xf]
  %v49 = vld [vmem:[%s2 + $0x4] sm:$0xf]
  %v50 = vld [vmem:[%s2 + $0x8] sm:$0xf]
  %v51 = vld [vmem:[%s2 + $0xc] sm:$0xf]
  %v52 = vld [vmem:[%s3] sm:$0x1]
  %v54 = vlaneseq
  %v55 = vshrl.u32 %v54, 7
  %v56 = vsub.s32 0, %v55
  %v57 = vrot.slane %v52, %v56
  %v67 = vunpack.c.l.b16 %v39
  %v68 = vunpack.c.l.b16 %v40
  %v69 = vunpack.c.l.b16 %v41
  %v70 = vunpack.c.l.b16 %v42
  %v71 = vunpack.c.l.b16 %v43
  %v72 = vunpack.c.l.b16 %v44
  %v73 = vunpack.c.l.b16 %v45
  %v74 = vunpack.c.l.b16 %v46
  %v75 = vpack.c.b16 %v68, %v67
  %v76 = vpack.c.b16 %v70, %v69
  %v77 = vpack.c.b16 %v72, %v71
  %v78 = vpack.c.b16 %v74, %v73
  %vm79 = vcmask 64512
  %v81 = vsel %vm79, %v75, 0
  %v84 = vsel %vm79, %v76, 0
  %v87 = vsel %vm79, %v77, 0
  %v90 = vsel %vm79, %v78, 0
  %vm92 = vcmask 1043456
  %v94 = vsel %vm92, %v47, 0
  %96 = vmatprep.subr.bf16.mxu0 0
  %97 = vmatpush1.bf16.msra.mxu0 %v94
  %98 = vmatprep.subr.bf16.mxu0 0
  %99 = vmatpush1.bf16.msra.mxu0 0
  %100 = vmatprep.subr.bf16.mxu0 0
  %101 = vmatpush1.bf16.msra.mxu0 0
  %102 = vmatprep.subr.bf16.mxu0 0
  %103 = vmatpush1.bf16.msra.mxu0 0
  %104 = vmatprep.subr.bf16.mxu0 0
  %105 = vmatpush1.bf16.msra.mxu0 0
  %106 = vmatprep.subr.bf16.mxu0 0
  %107 = vmatpush1.bf16.msra.mxu0 0
  %108 = vmatprep.subr.bf16.mxu0 0
  %109 = vmatpush1.bf16.msra.mxu0 0
  %110 = vmatprep.subr.bf16.mxu0 0
  %111 = vmatpush1.bf16.msra.mxu0 0
  %112 = vmatprep.subr.bf16.mxu0 0
  %113 = vmatpush1.bf16.msra.mxu0 0
  %114 = vmatprep.subr.bf16.mxu0 0
  %115 = vmatpush1.bf16.msra.mxu0 0
  %116 = vmatprep.subr.bf16.mxu0 0
  %117 = vmatpush1.bf16.msra.mxu0 0
  %118 = vmatprep.subr.bf16.mxu0 0
  %119 = vmatpush1.bf16.msra.mxu0 0
  %120 = vmatprep.subr.bf16.mxu0 0
  %121 = vmatpush1.bf16.msra.mxu0 0
  %122 = vmatprep.subr.bf16.mxu0 0
  %123 = vmatpush1.bf16.msra.mxu0 0
  %124 = vmatprep.subr.bf16.mxu0 0
  %125 = vmatpush1.bf16.msra.mxu0 0
  %126 = vmatprep.subr.bf16.mxu0 0
  %127 = vmatpush1.bf16.msra.mxu0 0
  %128 = vmatprep.mubr.bf16.mxu0 0
  %129 = vmatmul.mubr.bf16.gmra.mrb[0].mxu0 %v81
  %v130 = vpop.f32.mrb[0].mxu0
  %v131 = vadd.f32 %v57, %v130
  %v132 = vpop.f32.mrb[0].mxu0
  %v133 = vpop.f32.mrb[0].mxu0
  %v134 = vadd.f32 %v57, %v133
  %v135 = vpop.f32.mrb[0].mxu0
  %136 = vmatprep.mubr.bf16.mxu0 0
  %137 = vmatmul.mubr.bf16.gmra.mrb[0].mxu0 %v84
  %v138 = vpop.f32.mrb[0].mxu0
  %v139 = vadd.f32 %v57, %v138
  %v140 = vpop.f32.mrb[0].mxu0
  %v141 = vpop.f32.mrb[0].mxu0
  %v142 = vadd.f32 %v57, %v141
  %v143 = vpop.f32.mrb[0].mxu0
  %144 = vmatprep.mubr.bf16.mxu0 0
  %145 = vmatmul.mubr.bf16.gmra.mrb[0].mxu0 %v87
  %v146 = vpop.f32.mrb[0].mxu0
  %v147 = vadd.f32 %v57, %v146
  %v148 = vpop.f32.mrb[0].mxu0
  %v149 = vpop.f32.mrb[0].mxu0
  %v150 = vadd.f32 %v57, %v149
  %v151 = vpop.f32.mrb[0].mxu0
  %152 = vmatprep.mubr.bf16.mxu0 0
  %153 = vmatmul.mubr.bf16.gmra.mrb[0].mxu0 %v90
  %v154 = vpop.f32.mrb[0].mxu0
  %v155 = vadd.f32 %v57, %v154
  %v156 = vpop.f32.mrb[0].mxu0
  %v157 = vpop.f32.mrb[0].mxu0
  %v158 = vadd.f32 %v57, %v157
  %v159 = vpop.f32.mrb[0].mxu0
  %160 = vdwg.mxu0
  %161 = vst [vmem:[#allocation2] sm:$0xff] %v131
  %162 = vst [vmem:[#allocation2 + $0x8] sm:$0xff] %v134
  %163 = vst [vmem:[#allocation2 + $0x10] sm:$0xff] %v139
  %164 = vst [vmem:[#allocation2 + $0x18] sm:$0xff] %v142
  %165 = vst [vmem:[#allocation2 + $0x20] sm:$0xff] %v147
  %166 = vst [vmem:[#allocation2 + $0x28] sm:$0xff] %v150
  %167 = vst [vmem:[#allocation2 + $0x30] sm:$0xff] %v155
  %168 = vst [vmem:[#allocation2 + $0x38] sm:$0xff] %v158
  %v169 = vld [vmem:[#allocation2] sm:$0xff]
  %v174 = vunpack.c.l.b16 %v48
  %v175 = vunpack.c.l.b16 %v49
  %v176 = vunpack.c.l.b16 %v50
  %v177 = vunpack.c.l.b16 %v51
  %v178 = vpack.c.b16 %v175, %v174
  %v179 = vpack.c.b16 %v177, %v176
  %vm182 = vcmask 261120
  %v184 = vsel %vm182, 0, 0
  %186 = vmatprep.subr.bf16.mxu0 0
  %187 = vmatpush1.bf16.msra.mxu0 %v178
  %188 = vmatprep.subr.bf16.mxu0 0
  %189 = vmatpush1.bf16.msra.mxu0 %v179
  %190 = vmatprep.subr.bf16.mxu0 0
  %191 = vmatpush1.bf16.msra.mxu0 0
  %192 = vmatprep.subr.bf16.mxu0 0
  %193 = vmatpush1.bf16.msra.mxu0 0
  %194 = vmatprep.subr.bf16.mxu0 0
  %195 = vmatpush1.bf16.msra.mxu0 0
  %196 = vmatprep.subr.bf16.mxu0 0
  %197 = vmatpush1.bf16.msra.mxu0 0
  %198 = vmatprep.subr.bf16.mxu0 0
  %199 = vmatpush1.bf16.msra.mxu0 0
  %200 = vmatprep.subr.bf16.mxu0 0
  %201 = vmatpush1.bf16.msra.mxu0 0
  %202 = vmatprep.subr.bf16.mxu0 0
  %203 = vmatpush1.bf16.msra.mxu0 0
  %204 = vmatprep.subr.bf16.mxu0 0
  %205 = vmatpush1.bf16.msra.mxu0 0
  %206 = vmatprep.subr.bf16.mxu0 0
  %207 = vmatpush1.bf16.msra.mxu0 0
  %208 = vmatprep.subr.bf16.mxu0 0
  %209 = vmatpush1.bf16.msra.mxu0 0
  %210 = vmatprep.subr.bf16.mxu0 0
  %211 = vmatpush1.bf16.msra.mxu0 0
  %212 = vmatprep.subr.bf16.mxu0 0
  %213 = vmatpush1.bf16.msra.mxu0 0
  %214 = vmatprep.subr.bf16.mxu0 0
  %215 = vmatpush1.bf16.msra.mxu0 0
  %216 = vmatprep.subr.bf16.mxu0 0
  %217 = vmatpush1.bf16.msra.mxu0 0
  %218 = vmatprep.mubr.bf16.mxu0 0
  %219 = vmatmul.mubr.bf16.gmra.mrb[0].mxu0 %v184
  %v220 = vpop.f32.mrb[0].mxu0
  %v221 = vadd.f32 0.0, %v220
  %v222 = vpop.f32.mrb[0].mxu0
  %v223 = vpop.f32.mrb[0].mxu0
  %v224 = vpop.f32.mrb[0].mxu0
  %225 = vdwg.mxu0
  %v226 = vadd.f32 %v169, %v221
  %v227 = vmul.f32 %v226, %v38
  %v228 = vtanh.pop %v227
  %v229 = vadd.f32 %v228, 1.0
  %v230 = vmul.f32 %v229, 0.5
  %v231 = vsel %vm37, %v228, %v230
  %v232 = vmul.f32 %v231, 0.0
  %234 = vrot.lane.b32.xlu0 %v231, 64
  %v235 = vpop.permute.xlu0 %234
  %v237 = vmul.f32 %v231, %v235
  %239 = vrot.lane.b32.xlu0 %v237, 32
  %v240 = vpop.permute.xlu0 %239
  %v242 = vadd.f32 %v232, %v240
  %v243 = vtanh.pop %v242
  %245 = vrot.lane.b32.xlu0 %v243, 64
  %v246 = vpop.permute.xlu0 %245
  %v248 = vmul.f32 %v231, %v246
  %250 = vrot.lane.b32.xlu0 %v248, 32
  %v251 = vpop.permute.xlu0 %250
  %253 = vst.msk [vmem:[#allocation3] sm:$0xff] %vm182, %v251
  %s254 = scalar_lea.vmem [#allocation2], 8
  %v255 = vld [vmem:[%s254] sm:$0xff]
  %v256 = vpack.c.bf16 %v248, %v248
  %258 = vrot.lane.b32.xlu0 %v256, 32
  %v259 = vpop.permute.xlu0 %258
  %v261 = vsel %vm182, %v259, 0
  %263 = vmatprep.subr.bf16.mxu0 0
  %264 = vmatpush1.bf16.msra.mxu0 %v178
  %265 = vmatprep.subr.bf16.mxu0 0
  %266 = vmatpush1.bf16.msra.mxu0 %v179
  %267 = vmatprep.subr.bf16.mxu0 0
  %268 = vmatpush1.bf16.msra.mxu0 0
  %269 = vmatprep.subr.bf16.mxu0 0
  %270 = vmatpush1.bf16.msra.mxu0 0
  %271 = vmatprep.subr.bf16.mxu0 0
  %272 = vmatpush1.bf16.msra.mxu0 0
  %273 = vmatprep.subr.bf16.mxu0 0
  %274 = vmatpush1.bf16.msra.mxu0 0
  %275 = vmatprep.subr.bf16.mxu0 0
  %276 = vmatpush1.bf16.msra.mxu0 0
  %277 = vmatprep.subr.bf16.mxu0 0
  %278 = vmatpush1.bf16.msra.mxu0 0
  %279 = vmatprep.subr.bf16.mxu0 0
  %280 = vmatpush1.bf16.msra.mxu0 0
  %281 = vmatprep.subr.bf16.mxu0 0
  %282 = vmatpush1.bf16.msra.mxu0 0
  %283 = vmatprep.subr.bf16.mxu0 0
  %284 = vmatpush1.bf16.msra.mxu0 0
  %285 = vmatprep.subr.bf16.mxu0 0
  %286 = vmatpush1.bf16.msra.mxu0 0
  %287 = vmatprep.subr.bf16.mxu0 0
  %288 = vmatpush1.bf16.msra.mxu0 0
  %289 = vmatprep.subr.bf16.mxu0 0
  %290 = vmatpush1.bf16.msra.mxu0 0
  %291 = vmatprep.subr.bf16.mxu0 0
  %292 = vmatpush1.bf16.msra.mxu0 0
  %293 = vmatprep.subr.bf16.mxu0 0
  %294 = vmatpush1.bf16.msra.mxu0 0
  %295 = vmatprep.mubr.bf16.mxu0 0
  %296 = vmatmul.mubr.bf16.gmra.mrb[0].mxu0 %v261
  %v297 = vpop.f32.mrb[0].mxu0
  %v298 = vadd.f32 0.0, %v297
  %v299 = vpop.f32.mrb[0].mxu0
  %v300 = vpop.f32.mrb[0].mxu0
  %v301 = vpop.f32.mrb[0].mxu0
  %302 = vdwg.mxu0
  %v303 = vadd.f32 %v255, %v298
  %v304 = vmul.f32 %v303, %v38
  %v305 = vtanh.pop %v304
  %v306 = vadd.f32 %v305, 1.0
  %v307 = vmul.f32 %v306, 0.5
  %v308 = vsel %vm37, %v305, %v307
  %v309 = vmul.f32 %v308, %v242
  %311 = vrot.lane.b32.xlu0 %v308, 64
  %v312 = vpop.permute.xlu0 %311
  %v314 = vmul.f32 %v308, %v312
  %316 = vrot.lane.b32.xlu0 %v314, 32
  %v317 = vpop.permute.xlu0 %316
  %v319 = vadd.f32 %v309, %v317
  %v320 = vtanh.pop %v319
  %322 = vrot.lane.b32.xlu0 %v320, 64
  %v323 = vpop.permute.xlu0 %322
  %v325 = vmul.f32 %v308, %v323
  %327 = vrot.lane.b32.xlu0 %v325, 32
  %v328 = vpop.permute.xlu0 %327
  %s330 = scalar_lea.vmem [#allocation3], 8
  %331 = vst.msk [vmem:[%s330] sm:$0xff] %vm182, %v328
  %s332 = scalar_lea.vmem [#allocation2], 16
  %v333 = vld [vmem:[%s332] sm:$0xff]
  %v334 = vpack.c.bf16 %v325, %v325
  %336 = vrot.lane.b32.xlu0 %v334, 32
  %v337 = vpop.permute.xlu0 %336
  %v339 = vsel %vm182, %v337, 0
  %341 = vmatprep.subr.bf16.mxu0 0
  %342 = vmatpush1.bf16.msra.mxu0 %v178
  %343 = vmatprep.subr.bf16.mxu0 0
  %344 = vmatpush1.bf16.msra.mxu0 %v179
  %345 = vmatprep.subr.bf16.mxu0 0
  %346 = vmatpush1.bf16.msra.mxu0 0
  %347 = vmatprep.subr.bf16.mxu0 0
  %348 = vmatpush1.bf16.msra.mxu0 0
  %349 = vmatprep.subr.bf16.mxu0 0
  %350 = vmatpush1.bf16.msra.mxu0 0
  %351 = vmatprep.subr.bf16.mxu0 0
  %352 = vmatpush1.bf16.msra.mxu0 0
  %353 = vmatprep.subr.bf16.mxu0 0
  %354 = vmatpush1.bf16.msra.mxu0 0
  %355 = vmatprep.subr.bf16.mxu0 0
  %356 = vmatpush1.bf16.msra.mxu0 0
  %357 = vmatprep.subr.bf16.mxu0 0
  %358 = vmatpush1.bf16.msra.mxu0 0
  %359 = vmatprep.subr.bf16.mxu0 0
  %360 = vmatpush1.bf16.msra.mxu0 0
  %361 = vmatprep.subr.bf16.mxu0 0
  %362 = vmatpush1.bf16.msra.mxu0 0
  %363 = vmatprep.subr.bf16.mxu0 0
  %364 = vmatpush1.bf16.msra.mxu0 0
  %365 = vmatprep.subr.bf16.mxu0 0
  %366 = vmatpush1.bf16.msra.mxu0 0
  %367 = vmatprep.subr.bf16.mxu0 0
  %368 = vmatpush1.bf16.msra.mxu0 0
  %369 = vmatprep.subr.bf16.mxu0 0
  %370 = vmatpush1.bf16.msra.mxu0 0
  %371 = vmatprep.subr.bf16.mxu0 0
  %372 = vmatpush1.bf16.msra.mxu0 0
  %373 = vmatprep.mubr.bf16.mxu0 0
  %374 = vmatmul.mubr.bf16.gmra.mrb[0].mxu0 %v339
  %v375 = vpop.f32.mrb[0].mxu0
  %v376 = vadd.f32 0.0, %v375
  %v377 = vpop.f32.mrb[0].mxu0
  %v378 = vpop.f32.mrb[0].mxu0
  %v379 = vpop.f32.mrb[0].mxu0
  %380 = vdwg.mxu0
  %v381 = vadd.f32 %v333, %v376
  %v382 = vmul.f32 %v381, %v38
  %v383 = vtanh.pop %v382
  %v384 = vadd.f32 %v383, 1.0
  %v385 = vmul.f32 %v384, 0.5
  %v386 = vsel %vm37, %v383, %v385
  %v387 = vmul.f32 %v386, %v319
  %389 = vrot.lane.b32.xlu0 %v386, 64
  %v390 = vpop.permute.xlu0 %389
  %v392 = vmul.f32 %v386, %v390
  %394 = vrot.lane.b32.xlu0 %v392, 32
  %v395 = vpop.permute.xlu0 %394
  %v397 = vadd.f32 %v387, %v395
  %v398 = vtanh.pop %v397
  %400 = vrot.lane.b32.xlu0 %v398, 64
  %v401 = vpop.permute.xlu0 %400
  %v403 = vmul.f32 %v386, %v401
  %405 = vrot.lane.b32.xlu0 %v403, 32
  %v406 = vpop.permute.xlu0 %405
  %s408 = scalar_lea.vmem [#allocation3], 16
  %409 = vst.msk [vmem:[%s408] sm:$0xff] %vm182, %v406
  %s410 = scalar_lea.vmem [#allocation2], 24
  %v411 = vld [vmem:[%s410] sm:$0xff]
  %v412 = vpack.c.bf16 %v403, %v403
  %414 = vrot.lane.b32.xlu0 %v412, 32
  %v415 = vpop.permute.xlu0 %414
  %v417 = vsel %vm182, %v415, 0
  %419 = vmatprep.subr.bf16.mxu0 0
  %420 = vmatpush1.bf16.msra.mxu0 %v178
  %421 = vmatprep.subr.bf16.mxu0 0
  %422 = vmatpush1.bf16.msra.mxu0 %v179
  %423 = vmatprep.subr.bf16.mxu0 0
  %424 = vmatpush1.bf16.msra.mxu0 0
  %425 = vmatprep.subr.bf16.mxu0 0
  %426 = vmatpush1.bf16.msra.mxu0 0
  %427 = vmatprep.subr.bf16.mxu0 0
  %428 = vmatpush1.bf16.msra.mxu0 0
  %429 = vmatprep.subr.bf16.mxu0 0
  %430 = vmatpush1.bf16.msra.mxu0 0
  %431 = vmatprep.subr.bf16.mxu0 0
  %432 = vmatpush1.bf16.msra.mxu0 0
  %433 = vmatprep.subr.bf16.mxu0 0
  %434 = vmatpush1.bf16.msra.mxu0 0
  %435 = vmatprep.subr.bf16.mxu0 0
  %436 = vmatpush1.bf16.msra.mxu0 0
  %437 = vmatprep.subr.bf16.mxu0 0
  %438 = vmatpush1.bf16.msra.mxu0 0
  %439 = vmatprep.subr.bf16.mxu0 0
  %440 = vmatpush1.bf16.msra.mxu0 0
  %441 = vmatprep.subr.bf16.mxu0 0
  %442 = vmatpush1.bf16.msra.mxu0 0
  %443 = vmatprep.subr.bf16.mxu0 0
  %444 = vmatpush1.bf16.msra.mxu0 0
  %445 = vmatprep.subr.bf16.mxu0 0
  %446 = vmatpush1.bf16.msra.mxu0 0
  %447 = vmatprep.subr.bf16.mxu0 0
  %448 = vmatpush1.bf16.msra.mxu0 0
  %449 = vmatprep.subr.bf16.mxu0 0
  %450 = vmatpush1.bf16.msra.mxu0 0
  %451 = vmatprep.mubr.bf16.mxu0 0
  %452 = vmatmul.mubr.bf16.gmra.mrb[0].mxu0 %v417
  %v453 = vpop.f32.mrb[0].mxu0
  %v454 = vadd.f32 0.0, %v453
  %v455 = vpop.f32.mrb[0].mxu0
  %v456 = vpop.f32.mrb[0].mxu0
  %v457 = vpop.f32.mrb[0].mxu0
  %458 = vdwg.mxu0
  %v459 = vadd.f32 %v411, %v454
  %v460 = vmul.f32 %v459, %v38
  %v461 = vtanh.pop %v460
  %v462 = vadd.f32 %v461, 1.0
  %v463 = vmul.f32 %v462, 0.5
  %v464 = vsel %vm37, %v461, %v463
  %v465 = vmul.f32 %v464, %v397
  %467 = vrot.lane.b32.xlu0 %v464, 64
  %v468 = vpop.permute.xlu0 %467
  %v470 = vmul.f32 %v464, %v468
  %472 = vrot.lane.b32.xlu0 %v470, 32
  %v473 = vpop.permute.xlu0 %472
  %v475 = vadd.f32 %v465, %v473
  %v476 = vtanh.pop %v475
  %478 = vrot.lane.b32.xlu0 %v476, 64
  %v479 = vpop.permute.xlu0 %478
  %v481 = vmul.f32 %v464, %v479
  %483 = vrot.lane.b32.xlu0 %v481, 32
  %v484 = vpop.permute.xlu0 %483
  %s486 = scalar_lea.vmem [#allocation3], 24
  %487 = vst.msk [vmem:[%s486] sm:$0xff] %vm182, %v484
  %s488 = scalar_lea.vmem [#allocation2], 32
  %v489 = vld [vmem:[%s488] sm:$0xff]
  %v490 = vpack.c.bf16 %v481, %v481
  %492 = vrot.lane.b32.xlu0 %v490, 32
  %v493 = vpop.permute.xlu0 %492
  %v495 = vsel %vm182, %v493, 0
  %497 = vmatprep.subr.bf16.mxu0 0
  %498 = vmatpush1.bf16.msra.mxu0 %v178
  %499 = vmatprep.subr.bf16.mxu0 0
  %500 = vmatpush1.bf16.msra.mxu0 %v179
  %501 = vmatprep.subr.bf16.mxu0 0
  %502 = vmatpush1.bf16.msra.mxu0 0
  %503 = vmatprep.subr.bf16.mxu0 0
  %504 = vmatpush1.bf16.msra.mxu0 0
  %505 = vmatprep.subr.bf16.mxu0 0
  %506 = vmatpush1.bf16.msra.mxu0 0
  %507 = vmatprep.subr.bf16.mxu0 0
  %508 = vmatpush1.bf16.msra.mxu0 0
  %509 = vmatprep.subr.bf16.mxu0 0
  %510 = vmatpush1.bf16.msra.mxu0 0
  %511 = vmatprep.subr.bf16.mxu0 0
  %512 = vmatpush1.bf16.msra.mxu0 0
  %513 = vmatprep.subr.bf16.mxu0 0
  %514 = vmatpush1.bf16.msra.mxu0 0
  %515 = vmatprep.subr.bf16.mxu0 0
  %516 = vmatpush1.bf16.msra.mxu0 0
  %517 = vmatprep.subr.bf16.mxu0 0
  %518 = vmatpush1.bf16.msra.mxu0 0
  %519 = vmatprep.subr.bf16.mxu0 0
  %520 = vmatpush1.bf16.msra.mxu0 0
  %521 = vmatprep.subr.bf16.mxu0 0
  %522 = vmatpush1.bf16.msra.mxu0 0
  %523 = vmatprep.subr.bf16.mxu0 0
  %524 = vmatpush1.bf16.msra.mxu0 0
  %525 = vmatprep.subr.bf16.mxu0 0
  %526 = vmatpush1.bf16.msra.mxu0 0
  %527 = vmatprep.subr.bf16.mxu0 0
  %528 = vmatpush1.bf16.msra.mxu0 0
  %529 = vmatprep.mubr.bf16.mxu0 0
  %530 = vmatmul.mubr.bf16.gmra.mrb[0].mxu0 %v495
  %v531 = vpop.f32.mrb[0].mxu0
  %v532 = vadd.f32 0.0, %v531
  %v533 = vpop.f32.mrb[0].mxu0
  %v534 = vpop.f32.mrb[0].mxu0
  %v535 = vpop.f32.mrb[0].mxu0
  %536 = vdwg.mxu0
  %v537 = vadd.f32 %v489, %v532
  %v538 = vmul.f32 %v537, %v38
  %v539 = vtanh.pop %v538
  %v540 = vadd.f32 %v539, 1.0
  %v541 = vmul.f32 %v540, 0.5
  %v542 = vsel %vm37, %v539, %v541
  %v543 = vmul.f32 %v542, %v475
  %545 = vrot.lane.b32.xlu0 %v542, 64
  %v546 = vpop.permute.xlu0 %545
  %v548 = vmul.f32 %v542, %v546
  %550 = vrot.lane.b32.xlu0 %v548, 32
  %v551 = vpop.permute.xlu0 %550
  %v553 = vadd.f32 %v543, %v551
  %v554 = vtanh.pop %v553
  %556 = vrot.lane.b32.xlu0 %v554, 64
  %v557 = vpop.permute.xlu0 %556
  %v559 = vmul.f32 %v542, %v557
  %561 = vrot.lane.b32.xlu0 %v559, 32
  %v562 = vpop.permute.xlu0 %561
  %s564 = scalar_lea.vmem [#allocation3], 32
  %565 = vst.msk [vmem:[%s564] sm:$0xff] %vm182, %v562
  %s566 = scalar_lea.vmem [#allocation2], 40
  %v567 = vld [vmem:[%s566] sm:$0xff]
  %v568 = vpack.c.bf16 %v559, %v559
  %570 = vrot.lane.b32.xlu0 %v568, 32
  %v571 = vpop.permute.xlu0 %570
  %v573 = vsel %vm182, %v571, 0
  %575 = vmatprep.subr.bf16.mxu0 0
  %576 = vmatpush1.bf16.msra.mxu0 %v178
  %577 = vmatprep.subr.bf16.mxu0 0
  %578 = vmatpush1.bf16.msra.mxu0 %v179
  %579 = vmatprep.subr.bf16.mxu0 0
  %580 = vmatpush1.bf16.msra.mxu0 0
  %581 = vmatprep.subr.bf16.mxu0 0
  %582 = vmatpush1.bf16.msra.mxu0 0
  %583 = vmatprep.subr.bf16.mxu0 0
  %584 = vmatpush1.bf16.msra.mxu0 0
  %585 = vmatprep.subr.bf16.mxu0 0
  %586 = vmatpush1.bf16.msra.mxu0 0
  %587 = vmatprep.subr.bf16.mxu0 0
  %588 = vmatpush1.bf16.msra.mxu0 0
  %589 = vmatprep.subr.bf16.mxu0 0
  %590 = vmatpush1.bf16.msra.mxu0 0
  %591 = vmatprep.subr.bf16.mxu0 0
  %592 = vmatpush1.bf16.msra.mxu0 0
  %593 = vmatprep.subr.bf16.mxu0 0
  %594 = vmatpush1.bf16.msra.mxu0 0
  %595 = vmatprep.subr.bf16.mxu0 0
  %596 = vmatpush1.bf16.msra.mxu0 0
  %597 = vmatprep.subr.bf16.mxu0 0
  %598 = vmatpush1.bf16.msra.mxu0 0
  %599 = vmatprep.subr.bf16.mxu0 0
  %600 = vmatpush1.bf16.msra.mxu0 0
  %601 = vmatprep.subr.bf16.mxu0 0
  %602 = vmatpush1.bf16.msra.mxu0 0
  %603 = vmatprep.subr.bf16.mxu0 0
  %604 = vmatpush1.bf16.msra.mxu0 0
  %605 = vmatprep.subr.bf16.mxu0 0
  %606 = vmatpush1.bf16.msra.mxu0 0
  %607 = vmatprep.mubr.bf16.mxu0 0
  %608 = vmatmul.mubr.bf16.gmra.mrb[0].mxu0 %v573
  %v609 = vpop.f32.mrb[0].mxu0
  %v610 = vadd.f32 0.0, %v609
  %v611 = vpop.f32.mrb[0].mxu0
  %v612 = vpop.f32.mrb[0].mxu0
  %v613 = vpop.f32.mrb[0].mxu0
  %614 = vdwg.mxu0
  %v615 = vadd.f32 %v567, %v610
  %v616 = vmul.f32 %v615, %v38
  %v617 = vtanh.pop %v616
  %v618 = vadd.f32 %v617, 1.0
  %v619 = vmul.f32 %v618, 0.5
  %v620 = vsel %vm37, %v617, %v619
  %v621 = vmul.f32 %v620, %v553
  %623 = vrot.lane.b32.xlu0 %v620, 64
  %v624 = vpop.permute.xlu0 %623
  %v626 = vmul.f32 %v620, %v624
  %628 = vrot.lane.b32.xlu0 %v626, 32
  %v629 = vpop.permute.xlu0 %628
  %v631 = vadd.f32 %v621, %v629
  %v632 = vtanh.pop %v631
  %634 = vrot.lane.b32.xlu0 %v632, 64
  %v635 = vpop.permute.xlu0 %634
  %v637 = vmul.f32 %v620, %v635
  %639 = vrot.lane.b32.xlu0 %v637, 32
  %v640 = vpop.permute.xlu0 %639
  %s642 = scalar_lea.vmem [#allocation3], 40
  %643 = vst.msk [vmem:[%s642] sm:$0xff] %vm182, %v640
  %s644 = scalar_lea.vmem [#allocation2], 48
  %v645 = vld [vmem:[%s644] sm:$0xff]
  %v646 = vpack.c.bf16 %v637, %v637
  %648 = vrot.lane.b32.xlu0 %v646, 32
  %v649 = vpop.permute.xlu0 %648
  %v651 = vsel %vm182, %v649, 0
  %653 = vmatprep.subr.bf16.mxu0 0
  %654 = vmatpush1.bf16.msra.mxu0 %v178
  %655 = vmatprep.subr.bf16.mxu0 0
  %656 = vmatpush1.bf16.msra.mxu0 %v179
  %657 = vmatprep.subr.bf16.mxu0 0
  %658 = vmatpush1.bf16.msra.mxu0 0
  %659 = vmatprep.subr.bf16.mxu0 0
  %660 = vmatpush1.bf16.msra.mxu0 0
  %661 = vmatprep.subr.bf16.mxu0 0
  %662 = vmatpush1.bf16.msra.mxu0 0
  %663 = vmatprep.subr.bf16.mxu0 0
  %664 = vmatpush1.bf16.msra.mxu0 0
  %665 = vmatprep.subr.bf16.mxu0 0
  %666 = vmatpush1.bf16.msra.mxu0 0
  %667 = vmatprep.subr.bf16.mxu0 0
  %668 = vmatpush1.bf16.msra.mxu0 0
  %669 = vmatprep.subr.bf16.mxu0 0
  %670 = vmatpush1.bf16.msra.mxu0 0
  %671 = vmatprep.subr.bf16.mxu0 0
  %672 = vmatpush1.bf16.msra.mxu0 0
  %673 = vmatprep.subr.bf16.mxu0 0
  %674 = vmatpush1.bf16.msra.mxu0 0
  %675 = vmatprep.subr.bf16.mxu0 0
  %676 = vmatpush1.bf16.msra.mxu0 0
  %677 = vmatprep.subr.bf16.mxu0 0
  %678 = vmatpush1.bf16.msra.mxu0 0
  %679 = vmatprep.subr.bf16.mxu0 0
  %680 = vmatpush1.bf16.msra.mxu0 0
  %681 = vmatprep.subr.bf16.mxu0 0
  %682 = vmatpush1.bf16.msra.mxu0 0
  %683 = vmatprep.subr.bf16.mxu0 0
  %684 = vmatpush1.bf16.msra.mxu0 0
  %685 = vmatprep.mubr.bf16.mxu0 0
  %686 = vmatmul.mubr.bf16.gmra.mrb[0].mxu0 %v651
  %v687 = vpop.f32.mrb[0].mxu0
  %v688 = vadd.f32 0.0, %v687
  %v689 = vpop.f32.mrb[0].mxu0
  %v690 = vpop.f32.mrb[0].mxu0
  %v691 = vpop.f32.mrb[0].mxu0
  %692 = vdwg.mxu0
  %v693 = vadd.f32 %v645, %v688
  %v694 = vmul.f32 %v693, %v38
  %v695 = vtanh.pop %v694
  %v696 = vadd.f32 %v695, 1.0
  %v697 = vmul.f32 %v696, 0.5
  %v698 = vsel %vm37, %v695, %v697
  %v699 = vmul.f32 %v698, %v631
  %701 = vrot.lane.b32.xlu0 %v698, 64
  %v702 = vpop.permute.xlu0 %701
  %v704 = vmul.f32 %v698, %v702
  %706 = vrot.lane.b32.xlu0 %v704, 32
  %v707 = vpop.permute.xlu0 %706
  %v709 = vadd.f32 %v699, %v707
  %v710 = vtanh.pop %v709
  %712 = vrot.lane.b32.xlu0 %v710, 64
  %v713 = vpop.permute.xlu0 %712
  %v715 = vmul.f32 %v698, %v713
  %717 = vrot.lane.b32.xlu0 %v715, 32
  %v718 = vpop.permute.xlu0 %717
  %s720 = scalar_lea.vmem [#allocation3], 48
  %721 = vst.msk [vmem:[%s720] sm:$0xff] %vm182, %v718
  %s722 = scalar_lea.vmem [#allocation2], 56
  %v723 = vld [vmem:[%s722] sm:$0xff]
  %v724 = vpack.c.bf16 %v715, %v715
  %726 = vrot.lane.b32.xlu0 %v724, 32
  %v727 = vpop.permute.xlu0 %726
  %v729 = vsel %vm182, %v727, 0
  %731 = vmatprep.subr.bf16.mxu0 0
  %732 = vmatpush1.bf16.msra.mxu0 %v178
  %733 = vmatprep.subr.bf16.mxu0 0
  %734 = vmatpush1.bf16.msra.mxu0 %v179
  %735 = vmatprep.subr.bf16.mxu0 0
  %736 = vmatpush1.bf16.msra.mxu0 0
  %737 = vmatprep.subr.bf16.mxu0 0
  %738 = vmatpush1.bf16.msra.mxu0 0
  %739 = vmatprep.subr.bf16.mxu0 0
  %740 = vmatpush1.bf16.msra.mxu0 0
  %741 = vmatprep.subr.bf16.mxu0 0
  %742 = vmatpush1.bf16.msra.mxu0 0
  %743 = vmatprep.subr.bf16.mxu0 0
  %744 = vmatpush1.bf16.msra.mxu0 0
  %745 = vmatprep.subr.bf16.mxu0 0
  %746 = vmatpush1.bf16.msra.mxu0 0
  %747 = vmatprep.subr.bf16.mxu0 0
  %748 = vmatpush1.bf16.msra.mxu0 0
  %749 = vmatprep.subr.bf16.mxu0 0
  %750 = vmatpush1.bf16.msra.mxu0 0
  %751 = vmatprep.subr.bf16.mxu0 0
  %752 = vmatpush1.bf16.msra.mxu0 0
  %753 = vmatprep.subr.bf16.mxu0 0
  %754 = vmatpush1.bf16.msra.mxu0 0
  %755 = vmatprep.subr.bf16.mxu0 0
  %756 = vmatpush1.bf16.msra.mxu0 0
  %757 = vmatprep.subr.bf16.mxu0 0
  %758 = vmatpush1.bf16.msra.mxu0 0
  %759 = vmatprep.subr.bf16.mxu0 0
  %760 = vmatpush1.bf16.msra.mxu0 0
  %761 = vmatprep.subr.bf16.mxu0 0
  %762 = vmatpush1.bf16.msra.mxu0 0
  %763 = vmatprep.mubr.bf16.mxu0 0
  %764 = vmatmul.mubr.bf16.gmra.mrb[0].mxu0 %v729
  %v765 = vpop.f32.mrb[0].mxu0
  %v766 = vadd.f32 0.0, %v765
  %v767 = vpop.f32.mrb[0].mxu0
  %v768 = vpop.f32.mrb[0].mxu0
  %v769 = vpop.f32.mrb[0].mxu0
  %770 = vdwg.mxu0
  %v771 = vadd.f32 %v723, %v766
  %v772 = vmul.f32 %v771, %v38
  %v773 = vtanh.pop %v772
  %v774 = vadd.f32 %v773, 1.0
  %v775 = vmul.f32 %v774, 0.5
  %v776 = vsel %vm37, %v773, %v775
  %v777 = vmul.f32 %v776, %v709
  %779 = vrot.lane.b32.xlu0 %v776, 64
  %v780 = vpop.permute.xlu0 %779
  %v782 = vmul.f32 %v776, %v780
  %784 = vrot.lane.b32.xlu0 %v782, 32
  %v785 = vpop.permute.xlu0 %784
  %v787 = vadd.f32 %v777, %v785
  %v788 = vtanh.pop %v787
  %790 = vrot.lane.b32.xlu0 %v788, 64
  %v791 = vpop.permute.xlu0 %790
  %v793 = vmul.f32 %v776, %v791
  %795 = vrot.lane.b32.xlu0 %v793, 32
  %v796 = vpop.permute.xlu0 %795
  %s798 = scalar_lea.vmem [#allocation3], 56
  %799 = vst.msk [vmem:[%s798] sm:$0xff] %vm182, %v796
  %v800 = vld [vmem:[#allocation3] sm:$0xff]
  %v801 = vld [vmem:[#allocation3 + $0x8] sm:$0xff]
  %v802 = vld [vmem:[#allocation3 + $0x10] sm:$0xff]
  %v803 = vld [vmem:[#allocation3 + $0x18] sm:$0xff]
  %v804 = vld [vmem:[#allocation3 + $0x20] sm:$0xff]
  %v805 = vld [vmem:[#allocation3 + $0x28] sm:$0xff]
  %v806 = vld [vmem:[#allocation3 + $0x30] sm:$0xff]
  %v807 = vld [vmem:[#allocation3 + $0x38] sm:$0xff]
  %v808 = vpack.c.bf16 %v801, %v800
  %v809 = vpack.c.bf16 %v803, %v802
  %v810 = vpack.c.bf16 %v805, %v804
  %v811 = vpack.c.bf16 %v807, %v806
  %v812 = vld [vmem:[%s4] sm:$0xf]
  %v813 = vld [vmem:[%s4 + $0x4] sm:$0xf]
  %v814 = vld [vmem:[%s4 + $0x8] sm:$0xf]
  %v815 = vld [vmem:[%s4 + $0xc] sm:$0xf]
  %v816 = vld [vmem:[%s5] sm:$0xf]
  %v817 = vld [vmem:[%s5 + $0x4] sm:$0xf]
  %v818 = vld [vmem:[%s5 + $0x8] sm:$0xf]
  %v819 = vld [vmem:[%s5 + $0xc] sm:$0xf]
  %v820 = vld [vmem:[%s6] sm:$0x1]
  %v822 = vlaneseq
  %v823 = vshrl.u32 %v822, 7
  %v824 = vsub.s32 0, %v823
  %v825 = vrot.slane %v820, %v824
  %v831 = vunpack.c.l.b16 %v812
  %v832 = vunpack.c.l.b16 %v813
  %v833 = vunpack.c.l.b16 %v814
  %v834 = vunpack.c.l.b16 %v815
  %v835 = vpack.c.b16 %v832, %v831
  %v836 = vpack.c.b16 %v834, %v833
  %v840 = vsel %vm182, %v808, 0
  %v843 = vsel %vm182, %v809, 0
  %v846 = vsel %vm182, %v810, 0
  %v849 = vsel %vm182, %v811, 0
  %851 = vmatprep.subr.bf16.mxu0 0
  %852 = vmatpush1.bf16.msra.mxu0 %v835
  %853 = vmatprep.subr.bf16.mxu0 0
  %854 = vmatpush1.bf16.msra.mxu0 %v836
  %855 = vmatprep.subr.bf16.mxu0 0
  %856 = vmatpush1.bf16.msra.mxu0 0
  %857 = vmatprep.subr.bf16.mxu0 0
  %858 = vmatpush1.bf16.msra.mxu0 0
  %859 = vmatprep.subr.bf16.mxu0 0
  %860 = vmatpush1.bf16.msra.mxu0 0
  %861 = vmatprep.subr.bf16.mxu0 0
  %862 = vmatpush1.bf16.msra.mxu0 0
  %863 = vmatprep.subr.bf16.mxu0 0
  %864 = vmatpush1.bf16.msra.mxu0 0
  %865 = vmatprep.subr.bf16.mxu0 0
  %866 = vmatpush1.bf16.msra.mxu0 0
  %867 = vmatprep.subr.bf16.mxu0 0
  %868 = vmatpush1.bf16.msra.mxu0 0
  %869 = vmatprep.subr.bf16.mxu0 0
  %870 = vmatpush1.bf16.msra.mxu0 0
  %871 = vmatprep.subr.bf16.mxu0 0
  %872 = vmatpush1.bf16.msra.mxu0 0
  %873 = vmatprep.subr.bf16.mxu0 0
  %874 = vmatpush1.bf16.msra.mxu0 0
  %875 = vmatprep.subr.bf16.mxu0 0
  %876 = vmatpush1.bf16.msra.mxu0 0
  %877 = vmatprep.subr.bf16.mxu0 0
  %878 = vmatpush1.bf16.msra.mxu0 0
  %879 = vmatprep.subr.bf16.mxu0 0
  %880 = vmatpush1.bf16.msra.mxu0 0
  %881 = vmatprep.subr.bf16.mxu0 0
  %882 = vmatpush1.bf16.msra.mxu0 0
  %883 = vmatprep.mubr.bf16.mxu0 0
  %884 = vmatmul.mubr.bf16.gmra.mrb[0].mxu0 %v840
  %v885 = vpop.f32.mrb[0].mxu0
  %v886 = vadd.f32 %v825, %v885
  %v887 = vpop.f32.mrb[0].mxu0
  %v888 = vpop.f32.mrb[0].mxu0
  %v889 = vadd.f32 %v825, %v888
  %v890 = vpop.f32.mrb[0].mxu0
  %891 = vmatprep.mubr.bf16.mxu0 0
  %892 = vmatmul.mubr.bf16.gmra.mrb[0].mxu0 %v843
  %v893 = vpop.f32.mrb[0].mxu0
  %v894 = vadd.f32 %v825, %v893
  %v895 = vpop.f32.mrb[0].mxu0
  %v896 = vpop.f32.mrb[0].mxu0
  %v897 = vadd.f32 %v825, %v896
  %v898 = vpop.f32.mrb[0].mxu0
  %899 = vmatprep.mubr.bf16.mxu0 0
  %900 = vmatmul.mubr.bf16.gmra.mrb[0].mxu0 %v846
  %v901 = vpop.f32.mrb[0].mxu0
  %v902 = vadd.f32 %v825, %v901
  %v903 = vpop.f32.mrb[0].mxu0
  %v904 = vpop.f32.mrb[0].mxu0
  %v905 = vadd.f32 %v825, %v904
  %v906 = vpop.f32.mrb[0].mxu0
  %907 = vmatprep.mubr.bf16.mxu0 0
  %908 = vmatmul.mubr.bf16.gmra.mrb[0].mxu0 %v849
  %v909 = vpop.f32.mrb[0].mxu0
  %v910 = vadd.f32 %v825, %v909
  %v911 = vpop.f32.mrb[0].mxu0
  %v912 = vpop.f32.mrb[0].mxu0
  %v913 = vadd.f32 %v825, %v912
  %v914 = vpop.f32.mrb[0].mxu0
  %915 = vdwg.mxu0
  %916 = vst [vmem:[#allocation2] sm:$0xff] %v886
  %917 = vst [vmem:[#allocation2 + $0x8] sm:$0xff] %v889
  %918 = vst [vmem:[#allocation2 + $0x10] sm:$0xff] %v894
  %919 = vst [vmem:[#allocation2 + $0x18] sm:$0xff] %v897
  %920 = vst [vmem:[#allocation2 + $0x20] sm:$0xff] %v902
  %921 = vst [vmem:[#allocation2 + $0x28] sm:$0xff] %v905
  %922 = vst [vmem:[#allocation2 + $0x30] sm:$0xff] %v910
  %923 = vst [vmem:[#allocation2 + $0x38] sm:$0xff] %v913
  %v924 = vld [vmem:[#allocation2] sm:$0xff]
  %v929 = vunpack.c.l.b16 %v816
  %v930 = vunpack.c.l.b16 %v817
  %v931 = vunpack.c.l.b16 %v818
  %v932 = vunpack.c.l.b16 %v819
  %v933 = vpack.c.b16 %v930, %v929
  %v934 = vpack.c.b16 %v932, %v931
  %937 = vmatprep.subr.bf16.mxu0 0
  %938 = vmatpush1.bf16.msra.mxu0 %v933
  %939 = vmatprep.subr.bf16.mxu0 0
  %940 = vmatpush1.bf16.msra.mxu0 %v934
  %941 = vmatprep.subr.bf16.mxu0 0
  %942 = vmatpush1.bf16.msra.mxu0 0
  %943 = vmatprep.subr.bf16.mxu0 0
  %944 = vmatpush1.bf16.msra.mxu0 0
  %945 = vmatprep.subr.bf16.mxu0 0
  %946 = vmatpush1.bf16.msra.mxu0 0
  %947 = vmatprep.subr.bf16.mxu0 0
  %948 = vmatpush1.bf16.msra.mxu0 0
  %949 = vmatprep.subr.bf16.mxu0 0
  %950 = vmatpush1.bf16.msra.mxu0 0
  %951 = vmatprep.subr.bf16.mxu0 0
  %952 = vmatpush1.bf16.msra.mxu0 0
  %953 = vmatprep.subr.bf16.mxu0 0
  %954 = vmatpush1.bf16.msra.mxu0 0
  %955 = vmatprep.subr.bf16.mxu0 0
  %956 = vmatpush1.bf16.msra.mxu0 0
  %957 = vmatprep.subr.bf16.mxu0 0
  %958 = vmatpush1.bf16.msra.mxu0 0
  %959 = vmatprep.subr.bf16.mxu0 0
  %960 = vmatpush1.bf16.msra.mxu0 0
  %961 = vmatprep.subr.bf16.mxu0 0
  %962 = vmatpush1.bf16.msra.mxu0 0
  %963 = vmatprep.subr.bf16.mxu0 0
  %964 = vmatpush1.bf16.msra.mxu0 0
  %965 = vmatprep.subr.bf16.mxu0 0
  %966 = vmatpush1.bf16.msra.mxu0 0
  %967 = vmatprep.subr.bf16.mxu0 0
  %968 = vmatpush1.bf16.msra.mxu0 0
  %969 = vmatprep.mubr.bf16.mxu0 0
  %970 = vmatmul.mubr.bf16.gmra.mrb[0].mxu0 %v184
  %v971 = vpop.f32.mrb[0].mxu0
  %v972 = vadd.f32 0.0, %v971
  %v973 = vpop.f32.mrb[0].mxu0
  %v974 = vpop.f32.mrb[0].mxu0
  %v975 = vpop.f32.mrb[0].mxu0
  %976 = vdwg.mxu0
  %v977 = vadd.f32 %v924, %v972
  %v978 = vmul.f32 %v977, %v38
  %v979 = vtanh.pop %v978
  %v980 = vadd.f32 %v979, 1.0
  %v981 = vmul.f32 %v980, 0.5
  %v982 = vsel %vm37, %v979, %v981
  %v983 = vmul.f32 %v982, 0.0
  %985 = vrot.lane.b32.xlu0 %v982, 64
  %v986 = vpop.permute.xlu0 %985
  %v988 = vmul.f32 %v982, %v986
  %990 = vrot.lane.b32.xlu0 %v988, 32
  %v991 = vpop.permute.xlu0 %990
  %v993 = vadd.f32 %v983, %v991
  %v994 = vtanh.pop %v993
  %996 = vrot.lane.b32.xlu0 %v994, 64
  %v997 = vpop.permute.xlu0 %996
  %v999 = vmul.f32 %v982, %v997
  %v1000 = vld [vmem:[%s254] sm:$0xff]
  %v1001 = vpack.c.bf16 %v999, %v999
  %1003 = vrot.lane.b32.xlu0 %v1001, 32
  %v1004 = vpop.permute.xlu0 %1003
  %v1006 = vsel %vm182, %v1004, 0
  %1008 = vmatprep.subr.bf16.mxu0 0
  %1009 = vmatpush1.bf16.msra.mxu0 %v933
  %1010 = vmatprep.subr.bf16.mxu0 0
  %1011 = vmatpush1.bf16.msra.mxu0 %v934
  %1012 = vmatprep.subr.bf16.mxu0 0
  %1013 = vmatpush1.bf16.msra.mxu0 0
  %1014 = vmatprep.subr.bf16.mxu0 0
  %1015 = vmatpush1.bf16.msra.mxu0 0
  %1016 = vmatprep.subr.bf16.mxu0 0
  %1017 = vmatpush1.bf16.msra.mxu0 0
  %1018 = vmatprep.subr.bf16.mxu0 0
  %1019 = vmatpush1.bf16.msra.mxu0 0
  %1020 = vmatprep.subr.bf16.mxu0 0
  %1021 = vmatpush1.bf16.msra.mxu0 0
  %1022 = vmatprep.subr.bf16.mxu0 0
  %1023 = vmatpush1.bf16.msra.mxu0 0
  %1024 = vmatprep.subr.bf16.mxu0 0
  %1025 = vmatpush1.bf16.msra.mxu0 0
  %1026 = vmatprep.subr.bf16.mxu0 0
  %1027 = vmatpush1.bf16.msra.mxu0 0
  %1028 = vmatprep.subr.bf16.mxu0 0
  %1029 = vmatpush1.bf16.msra.mxu0 0
  %1030 = vmatprep.subr.bf16.mxu0 0
  %1031 = vmatpush1.bf16.msra.mxu0 0
  %1032 = vmatprep.subr.bf16.mxu0 0
  %1033 = vmatpush1.bf16.msra.mxu0 0
  %1034 = vmatprep.subr.bf16.mxu0 0
  %1035 = vmatpush1.bf16.msra.mxu0 0
  %1036 = vmatprep.subr.bf16.mxu0 0
  %1037 = vmatpush1.bf16.msra.mxu0 0
  %1038 = vmatprep.subr.bf16.mxu0 0
  %1039 = vmatpush1.bf16.msra.mxu0 0
  %1040 = vmatprep.mubr.bf16.mxu0 0
  %1041 = vmatmul.mubr.bf16.gmra.mrb[0].mxu0 %v1006
  %v1042 = vpop.f32.mrb[0].mxu0
  %v1043 = vadd.f32 0.0, %v1042
  %v1044 = vpop.f32.mrb[0].mxu0
  %v1045 = vpop.f32.mrb[0].mxu0
  %v1046 = vpop.f32.mrb[0].mxu0
  %1047 = vdwg.mxu0
  %v1048 = vadd.f32 %v1000, %v1043
  %v1049 = vmul.f32 %v1048, %v38
  %v1050 = vtanh.pop %v1049
  %v1051 = vadd.f32 %v1050, 1.0
  %v1052 = vmul.f32 %v1051, 0.5
  %v1053 = vsel %vm37, %v1050, %v1052
  %v1054 = vmul.f32 %v1053, %v993
  %1056 = vrot.lane.b32.xlu0 %v1053, 64
  %v1057 = vpop.permute.xlu0 %1056
  %v1059 = vmul.f32 %v1053, %v1057
  %1061 = vrot.lane.b32.xlu0 %v1059, 32
  %v1062 = vpop.permute.xlu0 %1061
  %v1064 = vadd.f32 %v1054, %v1062
  %v1065 = vtanh.pop %v1064
  %1067 = vrot.lane.b32.xlu0 %v1065, 64
  %v1068 = vpop.permute.xlu0 %1067
  %v1070 = vmul.f32 %v1053, %v1068
  %v1071 = vld [vmem:[%s332] sm:$0xff]
  %v1072 = vpack.c.bf16 %v1070, %v1070
  %1074 = vrot.lane.b32.xlu0 %v1072, 32
  %v1075 = vpop.permute.xlu0 %1074
  %v1077 = vsel %vm182, %v1075, 0
  %1079 = vmatprep.subr.bf16.mxu0 0
  %1080 = vmatpush1.bf16.msra.mxu0 %v933
  %1081 = vmatprep.subr.bf16.mxu0 0
  %1082 = vmatpush1.bf16.msra.mxu0 %v934
  %1083 = vmatprep.subr.bf16.mxu0 0
  %1084 = vmatpush1.bf16.msra.mxu0 0
  %1085 = vmatprep.subr.bf16.mxu0 0
  %1086 = vmatpush1.bf16.msra.mxu0 0
  %1087 = vmatprep.subr.bf16.mxu0 0
  %1088 = vmatpush1.bf16.msra.mxu0 0
  %1089 = vmatprep.subr.bf16.mxu0 0
  %1090 = vmatpush1.bf16.msra.mxu0 0
  %1091 = vmatprep.subr.bf16.mxu0 0
  %1092 = vmatpush1.bf16.msra.mxu0 0
  %1093 = vmatprep.subr.bf16.mxu0 0
  %1094 = vmatpush1.bf16.msra.mxu0 0
  %1095 = vmatprep.subr.bf16.mxu0 0
  %1096 = vmatpush1.bf16.msra.mxu0 0
  %1097 = vmatprep.subr.bf16.mxu0 0
  %1098 = vmatpush1.bf16.msra.mxu0 0
  %1099 = vmatprep.subr.bf16.mxu0 0
  %1100 = vmatpush1.bf16.msra.mxu0 0
  %1101 = vmatprep.subr.bf16.mxu0 0
  %1102 = vmatpush1.bf16.msra.mxu0 0
  %1103 = vmatprep.subr.bf16.mxu0 0
  %1104 = vmatpush1.bf16.msra.mxu0 0
  %1105 = vmatprep.subr.bf16.mxu0 0
  %1106 = vmatpush1.bf16.msra.mxu0 0
  %1107 = vmatprep.subr.bf16.mxu0 0
  %1108 = vmatpush1.bf16.msra.mxu0 0
  %1109 = vmatprep.subr.bf16.mxu0 0
  %1110 = vmatpush1.bf16.msra.mxu0 0
  %1111 = vmatprep.mubr.bf16.mxu0 0
  %1112 = vmatmul.mubr.bf16.gmra.mrb[0].mxu0 %v1077
  %v1113 = vpop.f32.mrb[0].mxu0
  %v1114 = vadd.f32 0.0, %v1113
  %v1115 = vpop.f32.mrb[0].mxu0
  %v1116 = vpop.f32.mrb[0].mxu0
  %v1117 = vpop.f32.mrb[0].mxu0
  %1118 = vdwg.mxu0
  %v1119 = vadd.f32 %v1071, %v1114
  %v1120 = vmul.f32 %v1119, %v38
  %v1121 = vtanh.pop %v1120
  %v1122 = vadd.f32 %v1121, 1.0
  %v1123 = vmul.f32 %v1122, 0.5
  %v1124 = vsel %vm37, %v1121, %v1123
  %v1125 = vmul.f32 %v1124, %v1064
  %1127 = vrot.lane.b32.xlu0 %v1124, 64
  %v1128 = vpop.permute.xlu0 %1127
  %v1130 = vmul.f32 %v1124, %v1128
  %1132 = vrot.lane.b32.xlu0 %v1130, 32
  %v1133 = vpop.permute.xlu0 %1132
  %v1135 = vadd.f32 %v1125, %v1133
  %v1136 = vtanh.pop %v1135
  %1138 = vrot.lane.b32.xlu0 %v1136, 64
  %v1139 = vpop.permute.xlu0 %1138
  %v1141 = vmul.f32 %v1124, %v1139
  %v1142 = vld [vmem:[%s410] sm:$0xff]
  %v1143 = vpack.c.bf16 %v1141, %v1141
  %1145 = vrot.lane.b32.xlu0 %v1143, 32
  %v1146 = vpop.permute.xlu0 %1145
  %v1148 = vsel %vm182, %v1146, 0
  %1150 = vmatprep.subr.bf16.mxu0 0
  %1151 = vmatpush1.bf16.msra.mxu0 %v933
  %1152 = vmatprep.subr.bf16.mxu0 0
  %1153 = vmatpush1.bf16.msra.mxu0 %v934
  %1154 = vmatprep.subr.bf16.mxu0 0
  %1155 = vmatpush1.bf16.msra.mxu0 0
  %1156 = vmatprep.subr.bf16.mxu0 0
  %1157 = vmatpush1.bf16.msra.mxu0 0
  %1158 = vmatprep.subr.bf16.mxu0 0
  %1159 = vmatpush1.bf16.msra.mxu0 0
  %1160 = vmatprep.subr.bf16.mxu0 0
  %1161 = vmatpush1.bf16.msra.mxu0 0
  %1162 = vmatprep.subr.bf16.mxu0 0
  %1163 = vmatpush1.bf16.msra.mxu0 0
  %1164 = vmatprep.subr.bf16.mxu0 0
  %1165 = vmatpush1.bf16.msra.mxu0 0
  %1166 = vmatprep.subr.bf16.mxu0 0
  %1167 = vmatpush1.bf16.msra.mxu0 0
  %1168 = vmatprep.subr.bf16.mxu0 0
  %1169 = vmatpush1.bf16.msra.mxu0 0
  %1170 = vmatprep.subr.bf16.mxu0 0
  %1171 = vmatpush1.bf16.msra.mxu0 0
  %1172 = vmatprep.subr.bf16.mxu0 0
  %1173 = vmatpush1.bf16.msra.mxu0 0
  %1174 = vmatprep.subr.bf16.mxu0 0
  %1175 = vmatpush1.bf16.msra.mxu0 0
  %1176 = vmatprep.subr.bf16.mxu0 0
  %1177 = vmatpush1.bf16.msra.mxu0 0
  %1178 = vmatprep.subr.bf16.mxu0 0
  %1179 = vmatpush1.bf16.msra.mxu0 0
  %1180 = vmatprep.subr.bf16.mxu0 0
  %1181 = vmatpush1.bf16.msra.mxu0 0
  %1182 = vmatprep.mubr.bf16.mxu0 0
  %1183 = vmatmul.mubr.bf16.gmra.mrb[0].mxu0 %v1148
  %v1184 = vpop.f32.mrb[0].mxu0
  %v1185 = vadd.f32 0.0, %v1184
  %v1186 = vpop.f32.mrb[0].mxu0
  %v1187 = vpop.f32.mrb[0].mxu0
  %v1188 = vpop.f32.mrb[0].mxu0
  %1189 = vdwg.mxu0
  %v1190 = vadd.f32 %v1142, %v1185
  %v1191 = vmul.f32 %v1190, %v38
  %v1192 = vtanh.pop %v1191
  %v1193 = vadd.f32 %v1192, 1.0
  %v1194 = vmul.f32 %v1193, 0.5
  %v1195 = vsel %vm37, %v1192, %v1194
  %v1196 = vmul.f32 %v1195, %v1135
  %1198 = vrot.lane.b32.xlu0 %v1195, 64
  %v1199 = vpop.permute.xlu0 %1198
  %v1201 = vmul.f32 %v1195, %v1199
  %1203 = vrot.lane.b32.xlu0 %v1201, 32
  %v1204 = vpop.permute.xlu0 %1203
  %v1206 = vadd.f32 %v1196, %v1204
  %v1207 = vtanh.pop %v1206
  %1209 = vrot.lane.b32.xlu0 %v1207, 64
  %v1210 = vpop.permute.xlu0 %1209
  %v1212 = vmul.f32 %v1195, %v1210
  %v1213 = vld [vmem:[%s488] sm:$0xff]
  %v1214 = vpack.c.bf16 %v1212, %v1212
  %1216 = vrot.lane.b32.xlu0 %v1214, 32
  %v1217 = vpop.permute.xlu0 %1216
  %v1219 = vsel %vm182, %v1217, 0
  %1221 = vmatprep.subr.bf16.mxu0 0
  %1222 = vmatpush1.bf16.msra.mxu0 %v933
  %1223 = vmatprep.subr.bf16.mxu0 0
  %1224 = vmatpush1.bf16.msra.mxu0 %v934
  %1225 = vmatprep.subr.bf16.mxu0 0
  %1226 = vmatpush1.bf16.msra.mxu0 0
  %1227 = vmatprep.subr.bf16.mxu0 0
  %1228 = vmatpush1.bf16.msra.mxu0 0
  %1229 = vmatprep.subr.bf16.mxu0 0
  %1230 = vmatpush1.bf16.msra.mxu0 0
  %1231 = vmatprep.subr.bf16.mxu0 0
  %1232 = vmatpush1.bf16.msra.mxu0 0
  %1233 = vmatprep.subr.bf16.mxu0 0
  %1234 = vmatpush1.bf16.msra.mxu0 0
  %1235 = vmatprep.subr.bf16.mxu0 0
  %1236 = vmatpush1.bf16.msra.mxu0 0
  %1237 = vmatprep.subr.bf16.mxu0 0
  %1238 = vmatpush1.bf16.msra.mxu0 0
  %1239 = vmatprep.subr.bf16.mxu0 0
  %1240 = vmatpush1.bf16.msra.mxu0 0
  %1241 = vmatprep.subr.bf16.mxu0 0
  %1242 = vmatpush1.bf16.msra.mxu0 0
  %1243 = vmatprep.subr.bf16.mxu0 0
  %1244 = vmatpush1.bf16.msra.mxu0 0
  %1245 = vmatprep.subr.bf16.mxu0 0
  %1246 = vmatpush1.bf16.msra.mxu0 0
  %1247 = vmatprep.subr.bf16.mxu0 0
  %1248 = vmatpush1.bf16.msra.mxu0 0
  %1249 = vmatprep.subr.bf16.mxu0 0
  %1250 = vmatpush1.bf16.msra.mxu0 0
  %1251 = vmatprep.subr.bf16.mxu0 0
  %1252 = vmatpush1.bf16.msra.mxu0 0
  %1253 = vmatprep.mubr.bf16.mxu0 0
  %1254 = vmatmul.mubr.bf16.gmra.mrb[0].mxu0 %v1219
  %v1255 = vpop.f32.mrb[0].mxu0
  %v1256 = vadd.f32 0.0, %v1255
  %v1257 = vpop.f32.mrb[0].mxu0
  %v1258 = vpop.f32.mrb[0].mxu0
  %v1259 = vpop.f32.mrb[0].mxu0
  %1260 = vdwg.mxu0
  %v1261 = vadd.f32 %v1213, %v1256
  %v1262 = vmul.f32 %v1261, %v38
  %v1263 = vtanh.pop %v1262
  %v1264 = vadd.f32 %v1263, 1.0
  %v1265 = vmul.f32 %v1264, 0.5
  %v1266 = vsel %vm37, %v1263, %v1265
  %v1267 = vmul.f32 %v1266, %v1206
  %1269 = vrot.lane.b32.xlu0 %v1266, 64
  %v1270 = vpop.permute.xlu0 %1269
  %v1272 = vmul.f32 %v1266, %v1270
  %1274 = vrot.lane.b32.xlu0 %v1272, 32
  %v1275 = vpop.permute.xlu0 %1274
  %v1277 = vadd.f32 %v1267, %v1275
  %v1278 = vtanh.pop %v1277
  %1280 = vrot.lane.b32.xlu0 %v1278, 64
  %v1281 = vpop.permute.xlu0 %1280
  %v1283 = vmul.f32 %v1266, %v1281
  %v1284 = vld [vmem:[%s566] sm:$0xff]
  %v1285 = vpack.c.bf16 %v1283, %v1283
  %1287 = vrot.lane.b32.xlu0 %v1285, 32
  %v1288 = vpop.permute.xlu0 %1287
  %v1290 = vsel %vm182, %v1288, 0
  %1292 = vmatprep.subr.bf16.mxu0 0
  %1293 = vmatpush1.bf16.msra.mxu0 %v933
  %1294 = vmatprep.subr.bf16.mxu0 0
  %1295 = vmatpush1.bf16.msra.mxu0 %v934
  %1296 = vmatprep.subr.bf16.mxu0 0
  %1297 = vmatpush1.bf16.msra.mxu0 0
  %1298 = vmatprep.subr.bf16.mxu0 0
  %1299 = vmatpush1.bf16.msra.mxu0 0
  %1300 = vmatprep.subr.bf16.mxu0 0
  %1301 = vmatpush1.bf16.msra.mxu0 0
  %1302 = vmatprep.subr.bf16.mxu0 0
  %1303 = vmatpush1.bf16.msra.mxu0 0
  %1304 = vmatprep.subr.bf16.mxu0 0
  %1305 = vmatpush1.bf16.msra.mxu0 0
  %1306 = vmatprep.subr.bf16.mxu0 0
  %1307 = vmatpush1.bf16.msra.mxu0 0
  %1308 = vmatprep.subr.bf16.mxu0 0
  %1309 = vmatpush1.bf16.msra.mxu0 0
  %1310 = vmatprep.subr.bf16.mxu0 0
  %1311 = vmatpush1.bf16.msra.mxu0 0
  %1312 = vmatprep.subr.bf16.mxu0 0
  %1313 = vmatpush1.bf16.msra.mxu0 0
  %1314 = vmatprep.subr.bf16.mxu0 0
  %1315 = vmatpush1.bf16.msra.mxu0 0
  %1316 = vmatprep.subr.bf16.mxu0 0
  %1317 = vmatpush1.bf16.msra.mxu0 0
  %1318 = vmatprep.subr.bf16.mxu0 0
  %1319 = vmatpush1.bf16.msra.mxu0 0
  %1320 = vmatprep.subr.bf16.mxu0 0
  %1321 = vmatpush1.bf16.msra.mxu0 0
  %1322 = vmatprep.subr.bf16.mxu0 0
  %1323 = vmatpush1.bf16.msra.mxu0 0
  %1324 = vmatprep.mubr.bf16.mxu0 0
  %1325 = vmatmul.mubr.bf16.gmra.mrb[0].mxu0 %v1290
  %v1326 = vpop.f32.mrb[0].mxu0
  %v1327 = vadd.f32 0.0, %v1326
  %v1328 = vpop.f32.mrb[0].mxu0
  %v1329 = vpop.f32.mrb[0].mxu0
  %v1330 = vpop.f32.mrb[0].mxu0
  %1331 = vdwg.mxu0
  %v1332 = vadd.f32 %v1284, %v1327
  %v1333 = vmul.f32 %v1332, %v38
  %v1334 = vtanh.pop %v1333
  %v1335 = vadd.f32 %v1334, 1.0
  %v1336 = vmul.f32 %v1335, 0.5
  %v1337 = vsel %vm37, %v1334, %v1336
  %v1338 = vmul.f32 %v1337, %v1277
  %1340 = vrot.lane.b32.xlu0 %v1337, 64
  %v1341 = vpop.permute.xlu0 %1340
  %v1343 = vmul.f32 %v1337, %v1341
  %1345 = vrot.lane.b32.xlu0 %v1343, 32
  %v1346 = vpop.permute.xlu0 %1345
  %v1348 = vadd.f32 %v1338, %v1346
  %v1349 = vtanh.pop %v1348
  %1351 = vrot.lane.b32.xlu0 %v1349, 64
  %v1352 = vpop.permute.xlu0 %1351
  %v1354 = vmul.f32 %v1337, %v1352
  %v1355 = vld [vmem:[%s644] sm:$0xff]
  %v1356 = vpack.c.bf16 %v1354, %v1354
  %1358 = vrot.lane.b32.xlu0 %v1356, 32
  %v1359 = vpop.permute.xlu0 %1358
  %v1361 = vsel %vm182, %v1359, 0
  %1363 = vmatprep.subr.bf16.mxu0 0
  %1364 = vmatpush1.bf16.msra.mxu0 %v933
  %1365 = vmatprep.subr.bf16.mxu0 0
  %1366 = vmatpush1.bf16.msra.mxu0 %v934
  %1367 = vmatprep.subr.bf16.mxu0 0
  %1368 = vmatpush1.bf16.msra.mxu0 0
  %1369 = vmatprep.subr.bf16.mxu0 0
  %1370 = vmatpush1.bf16.msra.mxu0 0
  %1371 = vmatprep.subr.bf16.mxu0 0
  %1372 = vmatpush1.bf16.msra.mxu0 0
  %1373 = vmatprep.subr.bf16.mxu0 0
  %1374 = vmatpush1.bf16.msra.mxu0 0
  %1375 = vmatprep.subr.bf16.mxu0 0
  %1376 = vmatpush1.bf16.msra.mxu0 0
  %1377 = vmatprep.subr.bf16.mxu0 0
  %1378 = vmatpush1.bf16.msra.mxu0 0
  %1379 = vmatprep.subr.bf16.mxu0 0
  %1380 = vmatpush1.bf16.msra.mxu0 0
  %1381 = vmatprep.subr.bf16.mxu0 0
  %1382 = vmatpush1.bf16.msra.mxu0 0
  %1383 = vmatprep.subr.bf16.mxu0 0
  %1384 = vmatpush1.bf16.msra.mxu0 0
  %1385 = vmatprep.subr.bf16.mxu0 0
  %1386 = vmatpush1.bf16.msra.mxu0 0
  %1387 = vmatprep.subr.bf16.mxu0 0
  %1388 = vmatpush1.bf16.msra.mxu0 0
  %1389 = vmatprep.subr.bf16.mxu0 0
  %1390 = vmatpush1.bf16.msra.mxu0 0
  %1391 = vmatprep.subr.bf16.mxu0 0
  %1392 = vmatpush1.bf16.msra.mxu0 0
  %1393 = vmatprep.subr.bf16.mxu0 0
  %1394 = vmatpush1.bf16.msra.mxu0 0
  %1395 = vmatprep.mubr.bf16.mxu0 0
  %1396 = vmatmul.mubr.bf16.gmra.mrb[0].mxu0 %v1361
  %v1397 = vpop.f32.mrb[0].mxu0
  %v1398 = vadd.f32 0.0, %v1397
  %v1399 = vpop.f32.mrb[0].mxu0
  %v1400 = vpop.f32.mrb[0].mxu0
  %v1401 = vpop.f32.mrb[0].mxu0
  %1402 = vdwg.mxu0
  %v1403 = vadd.f32 %v1355, %v1398
  %v1404 = vmul.f32 %v1403, %v38
  %v1405 = vtanh.pop %v1404
  %v1406 = vadd.f32 %v1405, 1.0
  %v1407 = vmul.f32 %v1406, 0.5
  %v1408 = vsel %vm37, %v1405, %v1407
  %v1409 = vmul.f32 %v1408, %v1348
  %1411 = vrot.lane.b32.xlu0 %v1408, 64
  %v1412 = vpop.permute.xlu0 %1411
  %v1414 = vmul.f32 %v1408, %v1412
  %1416 = vrot.lane.b32.xlu0 %v1414, 32
  %v1417 = vpop.permute.xlu0 %1416
  %v1419 = vadd.f32 %v1409, %v1417
  %v1420 = vtanh.pop %v1419
  %1422 = vrot.lane.b32.xlu0 %v1420, 64
  %v1423 = vpop.permute.xlu0 %1422
  %v1425 = vmul.f32 %v1408, %v1423
  %v1426 = vld [vmem:[%s722] sm:$0xff]
  %v1427 = vpack.c.bf16 %v1425, %v1425
  %1429 = vrot.lane.b32.xlu0 %v1427, 32
  %v1430 = vpop.permute.xlu0 %1429
  %v1432 = vsel %vm182, %v1430, 0
  %1434 = vmatprep.subr.bf16.mxu0 0
  %1435 = vmatpush1.bf16.msra.mxu0 %v933
  %1436 = vmatprep.subr.bf16.mxu0 0
  %1437 = vmatpush1.bf16.msra.mxu0 %v934
  %1438 = vmatprep.subr.bf16.mxu0 0
  %1439 = vmatpush1.bf16.msra.mxu0 0
  %1440 = vmatprep.subr.bf16.mxu0 0
  %1441 = vmatpush1.bf16.msra.mxu0 0
  %1442 = vmatprep.subr.bf16.mxu0 0
  %1443 = vmatpush1.bf16.msra.mxu0 0
  %1444 = vmatprep.subr.bf16.mxu0 0
  %1445 = vmatpush1.bf16.msra.mxu0 0
  %1446 = vmatprep.subr.bf16.mxu0 0
  %1447 = vmatpush1.bf16.msra.mxu0 0
  %1448 = vmatprep.subr.bf16.mxu0 0
  %1449 = vmatpush1.bf16.msra.mxu0 0
  %1450 = vmatprep.subr.bf16.mxu0 0
  %1451 = vmatpush1.bf16.msra.mxu0 0
  %1452 = vmatprep.subr.bf16.mxu0 0
  %1453 = vmatpush1.bf16.msra.mxu0 0
  %1454 = vmatprep.subr.bf16.mxu0 0
  %1455 = vmatpush1.bf16.msra.mxu0 0
  %1456 = vmatprep.subr.bf16.mxu0 0
  %1457 = vmatpush1.bf16.msra.mxu0 0
  %1458 = vmatprep.subr.bf16.mxu0 0
  %1459 = vmatpush1.bf16.msra.mxu0 0
  %1460 = vmatprep.subr.bf16.mxu0 0
  %1461 = vmatpush1.bf16.msra.mxu0 0
  %1462 = vmatprep.subr.bf16.mxu0 0
  %1463 = vmatpush1.bf16.msra.mxu0 0
  %1464 = vmatprep.subr.bf16.mxu0 0
  %1465 = vmatpush1.bf16.msra.mxu0 0
  %1466 = vmatprep.mubr.bf16.mxu0 0
  %1467 = vmatmul.mubr.bf16.gmra.mrb[0].mxu0 %v1432
  %v1468 = vpop.f32.mrb[0].mxu0
  %v1469 = vadd.f32 0.0, %v1468
  %v1470 = vpop.f32.mrb[0].mxu0
  %v1471 = vpop.f32.mrb[0].mxu0
  %v1472 = vpop.f32.mrb[0].mxu0
  %1473 = vdwg.mxu0
  %v1474 = vadd.f32 %v1426, %v1469
  %v1475 = vmul.f32 %v1474, %v38
  %v1476 = vtanh.pop %v1475
  %v1477 = vadd.f32 %v1476, 1.0
  %v1478 = vmul.f32 %v1477, 0.5
  %v1479 = vsel %vm37, %v1476, %v1478
  %v1480 = vmul.f32 %v1479, %v1419
  %1482 = vrot.lane.b32.xlu0 %v1479, 64
  %v1483 = vpop.permute.xlu0 %1482
  %v1485 = vmul.f32 %v1479, %v1483
  %1487 = vrot.lane.b32.xlu0 %v1485, 32
  %v1488 = vpop.permute.xlu0 %1487
  %v1490 = vadd.f32 %v1480, %v1488
  %v1491 = vtanh.pop %v1490
  %1493 = vrot.lane.b32.xlu0 %v1491, 64
  %v1494 = vpop.permute.xlu0 %1493
  %v1496 = vmul.f32 %v1479, %v1494
  %v1497 = vpack.c.bf16 %v1496, %v1496
  %v1498 = vld [vmem:[%s7] sm:$0xf]
  %v1499 = vld [vmem:[%s7 + $0x4] sm:$0xf]
  %v1500 = vld [vmem:[%s7 + $0x8] sm:$0xf]
  %v1501 = vld [vmem:[%s7 + $0xc] sm:$0xf]
  %v1502 = vld [vmem:[%s8] sm:$0x1]
  %v1504 = vlaneseq
  %v1505 = vshrl.u32 %v1504, 7
  %v1506 = vsub.s32 0, %v1505
  %v1507 = vrot.slane %v1502, %v1506
  %1510 = vrot.lane.b32.xlu0 %v1497, 32
  %v1511 = vpop.permute.xlu0 %1510
  %v1516 = vunpack.c.l.b16 %v1498
  %v1517 = vunpack.c.l.b16 %v1499
  %v1518 = vunpack.c.l.b16 %v1500
  %v1519 = vunpack.c.l.b16 %v1501
  %v1520 = vpack.c.b16 %v1517, %v1516
  %v1521 = vpack.c.b16 %v1519, %v1518
  %v1525 = vsel %vm182, %v1511, 0
  %1527 = vmatprep.subr.bf16.mxu0 0
  %1528 = vmatpush1.bf16.msra.mxu0 %v1520
  %1529 = vmatprep.subr.bf16.mxu0 0
  %1530 = vmatpush1.bf16.msra.mxu0 %v1521
  %1531 = vmatprep.subr.bf16.mxu0 0
  %1532 = vmatpush1.bf16.msra.mxu0 0
  %1533 = vmatprep.subr.bf16.mxu0 0
  %1534 = vmatpush1.bf16.msra.mxu0 0
  %1535 = vmatprep.subr.bf16.mxu0 0
  %1536 = vmatpush1.bf16.msra.mxu0 0
  %1537 = vmatprep.subr.bf16.mxu0 0
  %1538 = vmatpush1.bf16.msra.mxu0 0
  %1539 = vmatprep.subr.bf16.mxu0 0
  %1540 = vmatpush1.bf16.msra.mxu0 0
  %1541 = vmatprep.subr.bf16.mxu0 0
  %1542 = vmatpush1.bf16.msra.mxu0 0
  %1543 = vmatprep.subr.bf16.mxu0 0
  %1544 = vmatpush1.bf16.msra.mxu0 0
  %1545 = vmatprep.subr.bf16.mxu0 0
  %1546 = vmatpush1.bf16.msra.mxu0 0
  %1547 = vmatprep.subr.bf16.mxu0 0
  %1548 = vmatpush1.bf16.msra.mxu0 0
  %1549 = vmatprep.subr.bf16.mxu0 0
  %1550 = vmatpush1.bf16.msra.mxu0 0
  %1551 = vmatprep.subr.bf16.mxu0 0
  %1552 = vmatpush1.bf16.msra.mxu0 0
  %1553 = vmatprep.subr.bf16.mxu0 0
  %1554 = vmatpush1.bf16.msra.mxu0 0
  %1555 = vmatprep.subr.bf16.mxu0 0
  %1556 = vmatpush1.bf16.msra.mxu0 0
  %1557 = vmatprep.subr.bf16.mxu0 0
  %1558 = vmatpush1.bf16.msra.mxu0 0
  %1559 = vmatprep.mubr.bf16.mxu0 0
  %1560 = vmatmul.mubr.bf16.gmra.mrb[0].mxu0 %v1525
  %v1561 = vpop.f32.mrb[0].mxu0
  %v1562 = vadd.f32 %v1507, %v1561
  %v1563 = vpop.f32.mrb[0].mxu0
  %v1564 = vpop.f32.mrb[0].mxu0
  %v1565 = vpop.f32.mrb[0].mxu0
  %1566 = vdwg.mxu0
  %1567 = vst [vmem:[%s9] sm:$0xff] %v1562
  // Predicated region
  $region38: #{lstm_forward.1} parent=0 // pred_check
    _
  $region39: #{lstm_forward.1} parent=0 // pred_check_branch
    %1569 = sbr.rel (0) target = $region41
  $region40: #{lstm_forward.1} parent=0 // pred_region
    _
  $region41: #{lstm_forward.1} parent=0 // pred_fallthru
    _
  // Predicated region
  $region42: #{lstm_forward.1} parent=0 // pred_check
    _
  $region43: #{lstm_forward.1} parent=0 // pred_check_branch
    %1571 = sbr.rel (0) target = $region45
  $region44: #{lstm_forward.1} parent=0 // pred_region
    _
  $region45: #{lstm_forward.1} parent=0 // pred_fallthru
    _

</llo_original>
